<compile_context>
chip_gen: v7x
topology: tpu7x:2x2x1
jax: 0.10.0
libtpu: 0.0.40
codegen_flags: <defaults>
</compile_context>

<pallas_src>
import functools

import jax
import jax.numpy as jnp
from jax.experimental import pallas as pl
from jax.experimental.pallas import tpu as pltpu


def _lstm_cell_ifog(gates, c, H):
    """LSTM cell update from pre-activations with gate order [i, f, o, g].

    Only 3 transcendental pushes: sigmoid over the contiguous i|f|o lanes,
    tanh over the g lanes, tanh(c_new)."""
    sig = jax.nn.sigmoid(gates[:, : 3 * H])
    g = jnp.tanh(gates[:, 3 * H:])
    i = sig[:, 0 * H:1 * H]
    f = sig[:, 1 * H:2 * H]
    o = sig[:, 2 * H:3 * H]
    c_new = f * c + i * g
    h_new = o * jnp.tanh(c_new)
    return h_new, c_new


def encoder_decoder_kernel(x2d_ref,
                           wih_e_ref, whh_e_ref, b_e_ref,
                           whh_d0_ref, b_d0_ref,
                           whh_df_ref, b_df_ref,
                           w_efc2_ref, b_efc2_ref,
                           w_dfc_ref, b_dfc_ref,
                           out_ref,
                           *, B, seq_len, horizon):
    He = whh_e_ref.shape[0]
    Hd = whh_d0_ref.shape[0]

    # ---- load all weights once (no per-iteration ref loads / broadcasts) ----
    wih_e = wih_e_ref[...]
    whh_e = whh_e_ref[...]
    b_e = b_e_ref[...]
    whh_d0 = whh_d0_ref[...]
    b_d0 = b_d0_ref[...]
    whh_df = whh_df_ref[...]
    b_df = b_df_ref[...]

    # ---- encoder: all input projections in one well-shaped matmul ----
    # x2d rows are time-major: row index = t * B + b.
    gates_x = (jnp.dot(x2d_ref[...], wih_e, preferred_element_type=jnp.float32)
               + b_e)                                    # (seq_len*B, 4He)

    h = jnp.zeros((B, He), jnp.float32)
    c = jnp.zeros((B, He), jnp.float32)
    for t in range(seq_len):                              # static unroll (small)
        gates = (gates_x[t * B:(t + 1) * B, :]
                 + jnp.dot(h, whh_e, preferred_element_type=jnp.float32))
        h, c = _lstm_cell_ifog(gates, c, He)

    # ---- merged encoder_fc | encoder_fc_cell: one matmul, split by lanes ----
    hc = (jnp.dot(h, w_efc2_ref[...], preferred_element_type=jnp.float32)
          + b_efc2_ref[...])                              # (B, 2*Hd)
    dh = hc[:, :Hd]
    dc = hc[:, Hd:]

    # ---- decoder: decoder_fc folded into the recurrence for t >= 1 ----
    # step 0: in_0 = 0  ->  gates = dh @ W_hh + b            (unfused weights)
    # step t: in_t = dh_{t-1} @ W_dfc + b_dfc
    #         gates = dh_{t-1} @ (W_hh + W_dfc @ W_ih) + (b + b_dfc @ W_ih)
    dh_states = []
    for t in range(horizon):                              # static unroll (small)
        if t == 0:
            gates = jnp.dot(dh, whh_d0, preferred_element_type=jnp.float32) + b_d0
        else:
            gates = jnp.dot(dh, whh_df, preferred_element_type=jnp.float32) + b_df
        dh, dc = _lstm_cell_ifog(gates, dc, Hd)
        dh_states.append(dh)

    # ---- decoder_fc for all steps in one matmul, single output store ----
    dh_all = jnp.concatenate(dh_states, axis=0)           # (horizon*B, Hd)
    out_ref[...] = (jnp.dot(dh_all, w_dfc_ref[...],
                            preferred_element_type=jnp.float32)
                    + b_dfc_ref[...])                     # (horizon*B, Out)


def _reorder_gates_ifgo_to_ifog(w, H):
    """Permute the trailing 4H gate columns from [i,f,g,o] to [i,f,o,g]."""
    i = w[..., 0 * H:1 * H]
    f = w[..., 1 * H:2 * H]
    g = w[..., 2 * H:3 * H]
    o = w[..., 3 * H:4 * H]
    return jnp.concatenate([i, f, o, g], axis=-1)


def encoder_decoder_forward(x, params, horizon):
    B, S, In = x.shape
    He = params["whh_e_t"].shape[0]
    Hd = params["whh_d_t"].shape[0]
    Out = params["w_dfc_t"].shape[1]

    # --- prep (plain JAX, outside the kernel): gate reorder + algebraic fusions ---
    wih_e = _reorder_gates_ifgo_to_ifog(params["wih_e_t"], He)
    whh_e = _reorder_gates_ifgo_to_ifog(params["whh_e_t"], He)
    b_e = _reorder_gates_ifgo_to_ifog(params["b_e"], He)

    wih_d = _reorder_gates_ifgo_to_ifog(params["wih_d_t"], Hd)
    whh_d = _reorder_gates_ifgo_to_ifog(params["whh_d_t"], Hd)
    b_d = _reorder_gates_ifgo_to_ifog(params["b_d"], Hd)

    w_dfc = params["w_dfc_t"]                 # (Hd, Out)
    b_dfc = params["b_dfc"]                   # (1, Out)

    # Fold decoder_fc into the decoder recurrence (valid for t >= 1).
    whh_d_fused = whh_d + jnp.dot(w_dfc, wih_d)            # (Hd, 4Hd)
    b_d_fused = b_d + jnp.dot(b_dfc, wih_d)                # (1, 4Hd)

    # Merge encoder_fc and encoder_fc_cell into one (He, 2*Hd) matmul.
    w_efc2 = jnp.concatenate([params["w_efc_t"], params["w_efcc_t"]], axis=1)
    b_efc2 = jnp.concatenate([params["b_efc"], params["b_efcc"]], axis=1)

    # Pad batch to a multiple of 8 sublanes: aligned slices, better MXU rows.
    Bp = ((B + 7) // 8) * 8
    if Bp != B:
        x = jnp.pad(x, ((0, Bp - B), (0, 0), (0, 0)))

    # Time-major 2D slab: row index = t * Bp + b.
    x2d = jnp.transpose(x, (1, 0, 2)).reshape(S * Bp, In)

    operands = (
        x2d,
        wih_e, whh_e, b_e,
        whh_d, b_d,
        whh_d_fused, b_d_fused,
        w_efc2, b_efc2,
        w_dfc, b_dfc,
    )

    kernel = functools.partial(encoder_decoder_kernel,
                               B=Bp, seq_len=S, horizon=horizon)
    vmem_spec = pl.BlockSpec(memory_space=pltpu.MemorySpace.VMEM)
    # NOTE: for large batches on v7x (2 TensorCores) this could add a grid over
    # batch tiles with dimension_semantics=("parallel",); at B=2 it is moot.
    out2d = pl.pallas_call(
        kernel,
        out_shape=jax.ShapeDtypeStruct((horizon * Bp, Out), jnp.float32),
        in_specs=[vmem_spec] * len(operands),
        out_specs=vmem_spec,
    )(*operands)

    # (horizon*Bp, Out) -> (B, horizon, Out); drop batch padding.
    out = out2d.reshape(horizon, Bp, Out)[:, :B, :].transpose(1, 0, 2)
    return out


def make_params(key, input_size, enc_hidden, dec_hidden, output_size):
    """Deterministic synthetic parameters with PyTorch-default-like uniform init.
    Weights are stored pre-transposed for x @ W use; gate order is PyTorch's
    [i, f, g, o]. RNN cell biases b_ih and b_hh are pre-summed (equivalent)."""
    ks = jax.random.split(key, 14)

    def u(k, shape, bound):
        return jax.random.uniform(k, shape, jnp.float32, -bound, bound)

    be = 1.0 / jnp.sqrt(enc_hidden)
    bd = 1.0 / jnp.sqrt(dec_hidden)

    # encoder LSTMCell: weight_ih (4He, In), weight_hh (4He, He)
    wih_e = u(ks[0], (4 * enc_hidden, input_size), be)
    whh_e = u(ks[1], (4 * enc_hidden, enc_hidden), be)
    b_e = u(ks[2], (4 * enc_hidden,), be) + u(ks[3], (4 * enc_hidden,), be)

    # decoder LSTMCell: weight_ih (4Hd, Out), weight_hh (4Hd, Hd)
    wih_d = u(ks[4], (4 * dec_hidden, output_size), bd)
    whh_d = u(ks[5], (4 * dec_hidden, dec_hidden), bd)
    b_d = u(ks[6], (4 * dec_hidden,), bd) + u(ks[7], (4 * dec_hidden,), bd)

    # encoder_fc / encoder_fc_cell: Linear(He -> Hd), weight (Hd, He)
    w_efc = u(ks[8], (dec_hidden, enc_hidden), be)
    b_efc = u(ks[9], (dec_hidden,), be)
    w_efcc = u(ks[10], (dec_hidden, enc_hidden), be)
    b_efcc = u(ks[11], (dec_hidden,), be)

    # decoder_fc: Linear(Hd -> Out), weight (Out, Hd)
    w_dfc = u(ks[12], (output_size, dec_hidden), bd)
    b_dfc = u(ks[13], (output_size,), bd)

    return {
        "wih_e_t": wih_e.T, "whh_e_t": whh_e.T, "b_e": b_e.reshape(1, -1),
        "wih_d_t": wih_d.T, "whh_d_t": whh_d.T, "b_d": b_d.reshape(1, -1),
        "w_efc_t": w_efc.T, "b_efc": b_efc.reshape(1, -1),
        "w_efcc_t": w_efcc.T, "b_efcc": b_efcc.reshape(1, -1),
        "w_dfc_t": w_dfc.T, "b_dfc": b_dfc.reshape(1, -1),
    }


def reference_forward(x, params, horizon):
    """Pure-JAX reference mirroring the PyTorch forward (unfused math)."""
    B = x.shape[0]
    He = params["whh_e_t"].shape[0]
    Hd = params["whh_d_t"].shape[0]
    Out = params["w_dfc_t"].shape[1]

    def cell(x_t, h, c, wih_t, whh_t, b, H):
        g = x_t @ wih_t + h @ whh_t + b
        i = jax.nn.sigmoid(g[:, 0:H])
        f = jax.nn.sigmoid(g[:, H:2 * H])
        gg = jnp.tanh(g[:, 2 * H:3 * H])
        o = jax.nn.sigmoid(g[:, 3 * H:4 * H])
        c_new = f * c + i * gg
        return o * jnp.tanh(c_new), c_new

    h = jnp.zeros((B, He), jnp.float32)
    c = jnp.zeros((B, He), jnp.float32)
    for t in range(x.shape[1]):
        h, c = cell(x[:, t, :], h, c, params["wih_e_t"], params["whh_e_t"],
                    params["b_e"], He)
    dh = h @ params["w_efc_t"] + params["b_efc"]
    dc = h @ params["w_efcc_t"] + params["b_efcc"]
    in_i = jnp.zeros((B, Out), jnp.float32)
    outs = []
    for _ in range(horizon):
        dh, dc = cell(in_i, dh, dc, params["wih_d_t"], params["whh_d_t"],
                      params["b_d"], Hd)
        out_i = dh @ params["w_dfc_t"] + params["b_dfc"]
        outs.append(out_i)
        in_i = out_i
    return jnp.stack(outs, axis=1)


if __name__ == "__main__":
    # Small shapes implied by the forward: x is (batch, seq_len, input_size)
    batch = 2
    seq_len = 8
    input_size = 4
    enc_hidden = 32
    dec_hidden = 32
    output_size = 4
    horizon = 6  # integer horizon path
    # TODO(synk): list-valued `horizon` (post-hoc output[:, horizon-1, :] gather) is plain-JAX glue, not kernelized.

    key = jax.random.PRNGKey(0)
    kx, kp = jax.random.split(key)
    x = jax.random.normal(kx, (batch, seq_len, input_size), jnp.float32)
    params = make_params(kp, input_size, enc_hidden, dec_hidden, output_size)

    out = encoder_decoder_forward(x, params, horizon)
    out = jax.block_until_ready(out)

    ref = reference_forward(x, params, horizon)
    assert out.shape == (batch, horizon, output_size), out.shape
    assert jnp.allclose(out, ref, rtol=1e-4, atol=1e-4), (
        "mismatch: max abs err = %g" % float(jnp.max(jnp.abs(out - ref))))

    print("KERNEL_OK")
</pallas_src>

<mosaic_0001>
module attributes {stable_mosaic.version = 11 : i64} {
  func.func @encoder_decoder_kernel(%arg0: memref<64x4xf32, #tpu.memory_space<vmem>>, %arg1: memref<4x128xf32, #tpu.memory_space<vmem>>, %arg2: memref<32x128xf32, #tpu.memory_space<vmem>>, %arg3: memref<1x128xf32, #tpu.memory_space<vmem>>, %arg4: memref<32x128xf32, #tpu.memory_space<vmem>>, %arg5: memref<1x128xf32, #tpu.memory_space<vmem>>, %arg6: memref<32x128xf32, #tpu.memory_space<vmem>>, %arg7: memref<1x128xf32, #tpu.memory_space<vmem>>, %arg8: memref<32x64xf32, #tpu.memory_space<vmem>>, %arg9: memref<1x64xf32, #tpu.memory_space<vmem>>, %arg10: memref<32x4xf32, #tpu.memory_space<vmem>>, %arg11: memref<1x4xf32, #tpu.memory_space<vmem>>, %arg12: memref<48x4xf32, #tpu.memory_space<vmem>>) attributes {dimension_semantics = [], scalar_prefetch = 0 : i64, scratch_operands = 0 : i64, tpu.core_type = #tpu.core_type<tc>} {
    %c0 = arith.constant 0 : index
    %c0_0 = arith.constant 0 : index
    %0 = vector.load %arg1[%c0, %c0_0] : memref<4x128xf32, #tpu.memory_space<vmem>>, vector<4x128xf32>
    %c0_1 = arith.constant 0 : index
    %c0_2 = arith.constant 0 : index
    %1 = vector.load %arg2[%c0_1, %c0_2] : memref<32x128xf32, #tpu.memory_space<vmem>>, vector<32x128xf32>
    %c0_3 = arith.constant 0 : index
    %c0_4 = arith.constant 0 : index
    %2 = vector.load %arg3[%c0_3, %c0_4] : memref<1x128xf32, #tpu.memory_space<vmem>>, vector<1x128xf32>
    %c0_5 = arith.constant 0 : index
    %c0_6 = arith.constant 0 : index
    %3 = vector.load %arg4[%c0_5, %c0_6] : memref<32x128xf32, #tpu.memory_space<vmem>>, vector<32x128xf32>
    %c0_7 = arith.constant 0 : index
    %c0_8 = arith.constant 0 : index
    %4 = vector.load %arg5[%c0_7, %c0_8] : memref<1x128xf32, #tpu.memory_space<vmem>>, vector<1x128xf32>
    %c0_9 = arith.constant 0 : index
    %c0_10 = arith.constant 0 : index
    %5 = vector.load %arg6[%c0_9, %c0_10] : memref<32x128xf32, #tpu.memory_space<vmem>>, vector<32x128xf32>
    %c0_11 = arith.constant 0 : index
    %c0_12 = arith.constant 0 : index
    %6 = vector.load %arg7[%c0_11, %c0_12] : memref<1x128xf32, #tpu.memory_space<vmem>>, vector<1x128xf32>
    %c0_13 = arith.constant 0 : index
    %c0_14 = arith.constant 0 : index
    %7 = vector.load %arg0[%c0_13, %c0_14] : memref<64x4xf32, #tpu.memory_space<vmem>>, vector<64x4xf32>
    %cst = arith.constant dense<0.000000e+00> : vector<64x128xf32>
    %8 = tpu.matmul %7, %0, %cst {dimension_numbers = #tpu.dot_dimension_numbers<[1], [0], [0], [1], [0, 0, 1, 1], [], []>} : vector<64x4xf32>, vector<4x128xf32>, vector<64x128xf32> -> vector<64x128xf32>
    %9 = vector.broadcast %2 : vector<1x128xf32> to vector<64x128xf32>
    %10 = arith.addf %8, %9 : vector<64x128xf32>
    %cst_15 = arith.constant 0.000000e+00 : f32
    %11 = vector.broadcast %cst_15 : f32 to vector<8x32xf32>
    %cst_16 = arith.constant 0.000000e+00 : f32
    %12 = vector.broadcast %cst_16 : f32 to vector<8x32xf32>
    %13 = vector.extract_strided_slice %10 {offsets = [0, 0], sizes = [8, 128], strides = [1, 1]} : vector<64x128xf32> to vector<8x128xf32>
    %cst_17 = arith.constant dense<0.000000e+00> : vector<8x128xf32>
    %14 = tpu.matmul %11, %1, %cst_17 {dimension_numbers = #tpu.dot_dimension_numbers<[1], [0], [0], [1], [0, 0, 1, 1], [], []>} : vector<8x32xf32>, vector<32x128xf32>, vector<8x128xf32> -> vector<8x128xf32>
    %15 = arith.addf %13, %14 : vector<8x128xf32>
    %16 = vector.extract_strided_slice %15 {offsets = [0, 0], sizes = [8, 96], strides = [1, 1]} : vector<8x128xf32> to vector<8x96xf32>
    %17 = arith.negf %16 : vector<8x96xf32>
    %18 = math.exp %17 : vector<8x96xf32>
    %cst_18 = arith.constant 1.000000e+00 : f32
    %19 = vector.broadcast %cst_18 : f32 to vector<8x96xf32>
    %20 = arith.addf %19, %18 : vector<8x96xf32>
    %21 = arith.divf %19, %20 : vector<8x96xf32>
    %22 = vector.extract_strided_slice %15 {offsets = [0, 96], sizes = [8, 32], strides = [1, 1]} : vector<8x128xf32> to vector<8x32xf32>
    %23 = math.tanh %22 : vector<8x32xf32>
    %24 = vector.extract_strided_slice %21 {offsets = [0, 0], sizes = [8, 32], strides = [1, 1]} : vector<8x96xf32> to vector<8x32xf32>
    %25 = vector.extract_strided_slice %21 {offsets = [0, 32], sizes = [8, 32], strides = [1, 1]} : vector<8x96xf32> to vector<8x32xf32>
    %26 = vector.extract_strided_slice %21 {offsets = [0, 64], sizes = [8, 32], strides = [1, 1]} : vector<8x96xf32> to vector<8x32xf32>
    %27 = arith.mulf %25, %12 : vector<8x32xf32>
    %28 = arith.mulf %24, %23 : vector<8x32xf32>
    %29 = arith.addf %27, %28 : vector<8x32xf32>
    %30 = math.tanh %29 : vector<8x32xf32>
    %31 = arith.mulf %26, %30 : vector<8x32xf32>
    %32 = vector.extract_strided_slice %10 {offsets = [8, 0], sizes = [8, 128], strides = [1, 1]} : vector<64x128xf32> to vector<8x128xf32>
    %cst_19 = arith.constant dense<0.000000e+00> : vector<8x128xf32>
    %33 = tpu.matmul %31, %1, %cst_19 {dimension_numbers = #tpu.dot_dimension_numbers<[1], [0], [0], [1], [0, 0, 1, 1], [], []>} : vector<8x32xf32>, vector<32x128xf32>, vector<8x128xf32> -> vector<8x128xf32>
    %34 = arith.addf %32, %33 : vector<8x128xf32>
    %35 = vector.extract_strided_slice %34 {offsets = [0, 0], sizes = [8, 96], strides = [1, 1]} : vector<8x128xf32> to vector<8x96xf32>
    %36 = arith.negf %35 : vector<8x96xf32>
    %37 = math.exp %36 : vector<8x96xf32>
    %cst_20 = arith.constant 1.000000e+00 : f32
    %38 = vector.broadcast %cst_20 : f32 to vector<8x96xf32>
    %39 = arith.addf %38, %37 : vector<8x96xf32>
    %40 = arith.divf %38, %39 : vector<8x96xf32>
    %41 = vector.extract_strided_slice %34 {offsets = [0, 96], sizes = [8, 32], strides = [1, 1]} : vector<8x128xf32> to vector<8x32xf32>
    %42 = math.tanh %41 : vector<8x32xf32>
    %43 = vector.extract_strided_slice %40 {offsets = [0, 0], sizes = [8, 32], strides = [1, 1]} : vector<8x96xf32> to vector<8x32xf32>
    %44 = vector.extract_strided_slice %40 {offsets = [0, 32], sizes = [8, 32], strides = [1, 1]} : vector<8x96xf32> to vector<8x32xf32>
    %45 = vector.extract_strided_slice %40 {offsets = [0, 64], sizes = [8, 32], strides = [1, 1]} : vector<8x96xf32> to vector<8x32xf32>
    %46 = arith.mulf %44, %29 : vector<8x32xf32>
    %47 = arith.mulf %43, %42 : vector<8x32xf32>
    %48 = arith.addf %46, %47 : vector<8x32xf32>
    %49 = math.tanh %48 : vector<8x32xf32>
    %50 = arith.mulf %45, %49 : vector<8x32xf32>
    %51 = vector.extract_strided_slice %10 {offsets = [16, 0], sizes = [8, 128], strides = [1, 1]} : vector<64x128xf32> to vector<8x128xf32>
    %cst_21 = arith.constant dense<0.000000e+00> : vector<8x128xf32>
    %52 = tpu.matmul %50, %1, %cst_21 {dimension_numbers = #tpu.dot_dimension_numbers<[1], [0], [0], [1], [0, 0, 1, 1], [], []>} : vector<8x32xf32>, vector<32x128xf32>, vector<8x128xf32> -> vector<8x128xf32>
    %53 = arith.addf %51, %52 : vector<8x128xf32>
    %54 = vector.extract_strided_slice %53 {offsets = [0, 0], sizes = [8, 96], strides = [1, 1]} : vector<8x128xf32> to vector<8x96xf32>
    %55 = arith.negf %54 : vector<8x96xf32>
    %56 = math.exp %55 : vector<8x96xf32>
    %cst_22 = arith.constant 1.000000e+00 : f32
    %57 = vector.broadcast %cst_22 : f32 to vector<8x96xf32>
    %58 = arith.addf %57, %56 : vector<8x96xf32>
    %59 = arith.divf %57, %58 : vector<8x96xf32>
    %60 = vector.extract_strided_slice %53 {offsets = [0, 96], sizes = [8, 32], strides = [1, 1]} : vector<8x128xf32> to vector<8x32xf32>
    %61 = math.tanh %60 : vector<8x32xf32>
    %62 = vector.extract_strided_slice %59 {offsets = [0, 0], sizes = [8, 32], strides = [1, 1]} : vector<8x96xf32> to vector<8x32xf32>
    %63 = vector.extract_strided_slice %59 {offsets = [0, 32], sizes = [8, 32], strides = [1, 1]} : vector<8x96xf32> to vector<8x32xf32>
    %64 = vector.extract_strided_slice %59 {offsets = [0, 64], sizes = [8, 32], strides = [1, 1]} : vector<8x96xf32> to vector<8x32xf32>
    %65 = arith.mulf %63, %48 : vector<8x32xf32>
    %66 = arith.mulf %62, %61 : vector<8x32xf32>
    %67 = arith.addf %65, %66 : vector<8x32xf32>
    %68 = math.tanh %67 : vector<8x32xf32>
    %69 = arith.mulf %64, %68 : vector<8x32xf32>
    %70 = vector.extract_strided_slice %10 {offsets = [24, 0], sizes = [8, 128], strides = [1, 1]} : vector<64x128xf32> to vector<8x128xf32>
    %cst_23 = arith.constant dense<0.000000e+00> : vector<8x128xf32>
    %71 = tpu.matmul %69, %1, %cst_23 {dimension_numbers = #tpu.dot_dimension_numbers<[1], [0], [0], [1], [0, 0, 1, 1], [], []>} : vector<8x32xf32>, vector<32x128xf32>, vector<8x128xf32> -> vector<8x128xf32>
    %72 = arith.addf %70, %71 : vector<8x128xf32>
    %73 = vector.extract_strided_slice %72 {offsets = [0, 0], sizes = [8, 96], strides = [1, 1]} : vector<8x128xf32> to vector<8x96xf32>
    %74 = arith.negf %73 : vector<8x96xf32>
    %75 = math.exp %74 : vector<8x96xf32>
    %cst_24 = arith.constant 1.000000e+00 : f32
    %76 = vector.broadcast %cst_24 : f32 to vector<8x96xf32>
    %77 = arith.addf %76, %75 : vector<8x96xf32>
    %78 = arith.divf %76, %77 : vector<8x96xf32>
    %79 = vector.extract_strided_slice %72 {offsets = [0, 96], sizes = [8, 32], strides = [1, 1]} : vector<8x128xf32> to vector<8x32xf32>
    %80 = math.tanh %79 : vector<8x32xf32>
    %81 = vector.extract_strided_slice %78 {offsets = [0, 0], sizes = [8, 32], strides = [1, 1]} : vector<8x96xf32> to vector<8x32xf32>
    %82 = vector.extract_strided_slice %78 {offsets = [0, 32], sizes = [8, 32], strides = [1, 1]} : vector<8x96xf32> to vector<8x32xf32>
    %83 = vector.extract_strided_slice %78 {offsets = [0, 64], sizes = [8, 32], strides = [1, 1]} : vector<8x96xf32> to vector<8x32xf32>
    %84 = arith.mulf %82, %67 : vector<8x32xf32>
    %85 = arith.mulf %81, %80 : vector<8x32xf32>
    %86 = arith.addf %84, %85 : vector<8x32xf32>
    %87 = math.tanh %86 : vector<8x32xf32>
    %88 = arith.mulf %83, %87 : vector<8x32xf32>
    %89 = vector.extract_strided_slice %10 {offsets = [32, 0], sizes = [8, 128], strides = [1, 1]} : vector<64x128xf32> to vector<8x128xf32>
    %cst_25 = arith.constant dense<0.000000e+00> : vector<8x128xf32>
    %90 = tpu.matmul %88, %1, %cst_25 {dimension_numbers = #tpu.dot_dimension_numbers<[1], [0], [0], [1], [0, 0, 1, 1], [], []>} : vector<8x32xf32>, vector<32x128xf32>, vector<8x128xf32> -> vector<8x128xf32>
    %91 = arith.addf %89, %90 : vector<8x128xf32>
    %92 = vector.extract_strided_slice %91 {offsets = [0, 0], sizes = [8, 96], strides = [1, 1]} : vector<8x128xf32> to vector<8x96xf32>
    %93 = arith.negf %92 : vector<8x96xf32>
    %94 = math.exp %93 : vector<8x96xf32>
    %cst_26 = arith.constant 1.000000e+00 : f32
    %95 = vector.broadcast %cst_26 : f32 to vector<8x96xf32>
    %96 = arith.addf %95, %94 : vector<8x96xf32>
    %97 = arith.divf %95, %96 : vector<8x96xf32>
    %98 = vector.extract_strided_slice %91 {offsets = [0, 96], sizes = [8, 32], strides = [1, 1]} : vector<8x128xf32> to vector<8x32xf32>
    %99 = math.tanh %98 : vector<8x32xf32>
    %100 = vector.extract_strided_slice %97 {offsets = [0, 0], sizes = [8, 32], strides = [1, 1]} : vector<8x96xf32> to vector<8x32xf32>
    %101 = vector.extract_strided_slice %97 {offsets = [0, 32], sizes = [8, 32], strides = [1, 1]} : vector<8x96xf32> to vector<8x32xf32>
    %102 = vector.extract_strided_slice %97 {offsets = [0, 64], sizes = [8, 32], strides = [1, 1]} : vector<8x96xf32> to vector<8x32xf32>
    %103 = arith.mulf %101, %86 : vector<8x32xf32>
    %104 = arith.mulf %100, %99 : vector<8x32xf32>
    %105 = arith.addf %103, %104 : vector<8x32xf32>
    %106 = math.tanh %105 : vector<8x32xf32>
    %107 = arith.mulf %102, %106 : vector<8x32xf32>
    %108 = vector.extract_strided_slice %10 {offsets = [40, 0], sizes = [8, 128], strides = [1, 1]} : vector<64x128xf32> to vector<8x128xf32>
    %cst_27 = arith.constant dense<0.000000e+00> : vector<8x128xf32>
    %109 = tpu.matmul %107, %1, %cst_27 {dimension_numbers = #tpu.dot_dimension_numbers<[1], [0], [0], [1], [0, 0, 1, 1], [], []>} : vector<8x32xf32>, vector<32x128xf32>, vector<8x128xf32> -> vector<8x128xf32>
    %110 = arith.addf %108, %109 : vector<8x128xf32>
    %111 = vector.extract_strided_slice %110 {offsets = [0, 0], sizes = [8, 96], strides = [1, 1]} : vector<8x128xf32> to vector<8x96xf32>
    %112 = arith.negf %111 : vector<8x96xf32>
    %113 = math.exp %112 : vector<8x96xf32>
    %cst_28 = arith.constant 1.000000e+00 : f32
    %114 = vector.broadcast %cst_28 : f32 to vector<8x96xf32>
    %115 = arith.addf %114, %113 : vector<8x96xf32>
    %116 = arith.divf %114, %115 : vector<8x96xf32>
    %117 = vector.extract_strided_slice %110 {offsets = [0, 96], sizes = [8, 32], strides = [1, 1]} : vector<8x128xf32> to vector<8x32xf32>
    %118 = math.tanh %117 : vector<8x32xf32>
    %119 = vector.extract_strided_slice %116 {offsets = [0, 0], sizes = [8, 32], strides = [1, 1]} : vector<8x96xf32> to vector<8x32xf32>
    %120 = vector.extract_strided_slice %116 {offsets = [0, 32], sizes = [8, 32], strides = [1, 1]} : vector<8x96xf32> to vector<8x32xf32>
    %121 = vector.extract_strided_slice %116 {offsets = [0, 64], sizes = [8, 32], strides = [1, 1]} : vector<8x96xf32> to vector<8x32xf32>
    %122 = arith.mulf %120, %105 : vector<8x32xf32>
    %123 = arith.mulf %119, %118 : vector<8x32xf32>
    %124 = arith.addf %122, %123 : vector<8x32xf32>
    %125 = math.tanh %124 : vector<8x32xf32>
    %126 = arith.mulf %121, %125 : vector<8x32xf32>
    %127 = vector.extract_strided_slice %10 {offsets = [48, 0], sizes = [8, 128], strides = [1, 1]} : vector<64x128xf32> to vector<8x128xf32>
    %cst_29 = arith.constant dense<0.000000e+00> : vector<8x128xf32>
    %128 = tpu.matmul %126, %1, %cst_29 {dimension_numbers = #tpu.dot_dimension_numbers<[1], [0], [0], [1], [0, 0, 1, 1], [], []>} : vector<8x32xf32>, vector<32x128xf32>, vector<8x128xf32> -> vector<8x128xf32>
    %129 = arith.addf %127, %128 : vector<8x128xf32>
    %130 = vector.extract_strided_slice %129 {offsets = [0, 0], sizes = [8, 96], strides = [1, 1]} : vector<8x128xf32> to vector<8x96xf32>
    %131 = arith.negf %130 : vector<8x96xf32>
    %132 = math.exp %131 : vector<8x96xf32>
    %cst_30 = arith.constant 1.000000e+00 : f32
    %133 = vector.broadcast %cst_30 : f32 to vector<8x96xf32>
    %134 = arith.addf %133, %132 : vector<8x96xf32>
    %135 = arith.divf %133, %134 : vector<8x96xf32>
    %136 = vector.extract_strided_slice %129 {offsets = [0, 96], sizes = [8, 32], strides = [1, 1]} : vector<8x128xf32> to vector<8x32xf32>
    %137 = math.tanh %136 : vector<8x32xf32>
    %138 = vector.extract_strided_slice %135 {offsets = [0, 0], sizes = [8, 32], strides = [1, 1]} : vector<8x96xf32> to vector<8x32xf32>
    %139 = vector.extract_strided_slice %135 {offsets = [0, 32], sizes = [8, 32], strides = [1, 1]} : vector<8x96xf32> to vector<8x32xf32>
    %140 = vector.extract_strided_slice %135 {offsets = [0, 64], sizes = [8, 32], strides = [1, 1]} : vector<8x96xf32> to vector<8x32xf32>
    %141 = arith.mulf %139, %124 : vector<8x32xf32>
    %142 = arith.mulf %138, %137 : vector<8x32xf32>
    %143 = arith.addf %141, %142 : vector<8x32xf32>
    %144 = math.tanh %143 : vector<8x32xf32>
    %145 = arith.mulf %140, %144 : vector<8x32xf32>
    %146 = vector.extract_strided_slice %10 {offsets = [56, 0], sizes = [8, 128], strides = [1, 1]} : vector<64x128xf32> to vector<8x128xf32>
    %cst_31 = arith.constant dense<0.000000e+00> : vector<8x128xf32>
    %147 = tpu.matmul %145, %1, %cst_31 {dimension_numbers = #tpu.dot_dimension_numbers<[1], [0], [0], [1], [0, 0, 1, 1], [], []>} : vector<8x32xf32>, vector<32x128xf32>, vector<8x128xf32> -> vector<8x128xf32>
    %148 = arith.addf %146, %147 : vector<8x128xf32>
    %149 = vector.extract_strided_slice %148 {offsets = [0, 0], sizes = [8, 96], strides = [1, 1]} : vector<8x128xf32> to vector<8x96xf32>
    %150 = arith.negf %149 : vector<8x96xf32>
    %151 = math.exp %150 : vector<8x96xf32>
    %cst_32 = arith.constant 1.000000e+00 : f32
    %152 = vector.broadcast %cst_32 : f32 to vector<8x96xf32>
    %153 = arith.addf %152, %151 : vector<8x96xf32>
    %154 = arith.divf %152, %153 : vector<8x96xf32>
    %155 = vector.extract_strided_slice %148 {offsets = [0, 96], sizes = [8, 32], strides = [1, 1]} : vector<8x128xf32> to vector<8x32xf32>
    %156 = math.tanh %155 : vector<8x32xf32>
    %157 = vector.extract_strided_slice %154 {offsets = [0, 0], sizes = [8, 32], strides = [1, 1]} : vector<8x96xf32> to vector<8x32xf32>
    %158 = vector.extract_strided_slice %154 {offsets = [0, 32], sizes = [8, 32], strides = [1, 1]} : vector<8x96xf32> to vector<8x32xf32>
    %159 = vector.extract_strided_slice %154 {offsets = [0, 64], sizes = [8, 32], strides = [1, 1]} : vector<8x96xf32> to vector<8x32xf32>
    %160 = arith.mulf %158, %143 : vector<8x32xf32>
    %161 = arith.mulf %157, %156 : vector<8x32xf32>
    %162 = arith.addf %160, %161 : vector<8x32xf32>
    %163 = math.tanh %162 : vector<8x32xf32>
    %164 = arith.mulf %159, %163 : vector<8x32xf32>
    %c0_33 = arith.constant 0 : index
    %c0_34 = arith.constant 0 : index
    %165 = vector.load %arg8[%c0_33, %c0_34] : memref<32x64xf32, #tpu.memory_space<vmem>>, vector<32x64xf32>
    %cst_35 = arith.constant dense<0.000000e+00> : vector<8x64xf32>
    %166 = tpu.matmul %164, %165, %cst_35 {dimension_numbers = #tpu.dot_dimension_numbers<[1], [0], [0], [1], [0, 0, 1, 1], [], []>} : vector<8x32xf32>, vector<32x64xf32>, vector<8x64xf32> -> vector<8x64xf32>
    %c0_36 = arith.constant 0 : index
    %c0_37 = arith.constant 0 : index
    %167 = vector.load %arg9[%c0_36, %c0_37] : memref<1x64xf32, #tpu.memory_space<vmem>>, vector<1x64xf32>
    %168 = vector.broadcast %167 : vector<1x64xf32> to vector<8x64xf32>
    %169 = arith.addf %166, %168 : vector<8x64xf32>
    %170 = vector.extract_strided_slice %169 {offsets = [0, 0], sizes = [8, 32], strides = [1, 1]} : vector<8x64xf32> to vector<8x32xf32>
    %171 = vector.extract_strided_slice %169 {offsets = [0, 32], sizes = [8, 32], strides = [1, 1]} : vector<8x64xf32> to vector<8x32xf32>
    %cst_38 = arith.constant dense<0.000000e+00> : vector<8x128xf32>
    %172 = tpu.matmul %170, %3, %cst_38 {dimension_numbers = #tpu.dot_dimension_numbers<[1], [0], [0], [1], [0, 0, 1, 1], [], []>} : vector<8x32xf32>, vector<32x128xf32>, vector<8x128xf32> -> vector<8x128xf32>
    %173 = vector.broadcast %4 : vector<1x128xf32> to vector<8x128xf32>
    %174 = arith.addf %172, %173 : vector<8x128xf32>
    %175 = vector.extract_strided_slice %174 {offsets = [0, 0], sizes = [8, 96], strides = [1, 1]} : vector<8x128xf32> to vector<8x96xf32>
    %176 = arith.negf %175 : vector<8x96xf32>
    %177 = math.exp %176 : vector<8x96xf32>
    %cst_39 = arith.constant 1.000000e+00 : f32
    %178 = vector.broadcast %cst_39 : f32 to vector<8x96xf32>
    %179 = arith.addf %178, %177 : vector<8x96xf32>
    %180 = arith.divf %178, %179 : vector<8x96xf32>
    %181 = vector.extract_strided_slice %174 {offsets = [0, 96], sizes = [8, 32], strides = [1, 1]} : vector<8x128xf32> to vector<8x32xf32>
    %182 = math.tanh %181 : vector<8x32xf32>
    %183 = vector.extract_strided_slice %180 {offsets = [0, 0], sizes = [8, 32], strides = [1, 1]} : vector<8x96xf32> to vector<8x32xf32>
    %184 = vector.extract_strided_slice %180 {offsets = [0, 32], sizes = [8, 32], strides = [1, 1]} : vector<8x96xf32> to vector<8x32xf32>
    %185 = vector.extract_strided_slice %180 {offsets = [0, 64], sizes = [8, 32], strides = [1, 1]} : vector<8x96xf32> to vector<8x32xf32>
    %186 = arith.mulf %184, %171 : vector<8x32xf32>
    %187 = arith.mulf %183, %182 : vector<8x32xf32>
    %188 = arith.addf %186, %187 : vector<8x32xf32>
    %189 = math.tanh %188 : vector<8x32xf32>
    %190 = arith.mulf %185, %189 : vector<8x32xf32>
    %cst_40 = arith.constant dense<0.000000e+00> : vector<8x128xf32>
    %191 = tpu.matmul %190, %5, %cst_40 {dimension_numbers = #tpu.dot_dimension_numbers<[1], [0], [0], [1], [0, 0, 1, 1], [], []>} : vector<8x32xf32>, vector<32x128xf32>, vector<8x128xf32> -> vector<8x128xf32>
    %192 = vector.broadcast %6 : vector<1x128xf32> to vector<8x128xf32>
    %193 = arith.addf %191, %192 : vector<8x128xf32>
    %194 = vector.extract_strided_slice %193 {offsets = [0, 0], sizes = [8, 96], strides = [1, 1]} : vector<8x128xf32> to vector<8x96xf32>
    %195 = arith.negf %194 : vector<8x96xf32>
    %196 = math.exp %195 : vector<8x96xf32>
    %cst_41 = arith.constant 1.000000e+00 : f32
    %197 = vector.broadcast %cst_41 : f32 to vector<8x96xf32>
    %198 = arith.addf %197, %196 : vector<8x96xf32>
    %199 = arith.divf %197, %198 : vector<8x96xf32>
    %200 = vector.extract_strided_slice %193 {offsets = [0, 96], sizes = [8, 32], strides = [1, 1]} : vector<8x128xf32> to vector<8x32xf32>
    %201 = math.tanh %200 : vector<8x32xf32>
    %202 = vector.extract_strided_slice %199 {offsets = [0, 0], sizes = [8, 32], strides = [1, 1]} : vector<8x96xf32> to vector<8x32xf32>
    %203 = vector.extract_strided_slice %199 {offsets = [0, 32], sizes = [8, 32], strides = [1, 1]} : vector<8x96xf32> to vector<8x32xf32>
    %204 = vector.extract_strided_slice %199 {offsets = [0, 64], sizes = [8, 32], strides = [1, 1]} : vector<8x96xf32> to vector<8x32xf32>
    %205 = arith.mulf %203, %188 : vector<8x32xf32>
    %206 = arith.mulf %202, %201 : vector<8x32xf32>
    %207 = arith.addf %205, %206 : vector<8x32xf32>
    %208 = math.tanh %207 : vector<8x32xf32>
    %209 = arith.mulf %204, %208 : vector<8x32xf32>
    %cst_42 = arith.constant dense<0.000000e+00> : vector<8x128xf32>
    %210 = tpu.matmul %209, %5, %cst_42 {dimension_numbers = #tpu.dot_dimension_numbers<[1], [0], [0], [1], [0, 0, 1, 1], [], []>} : vector<8x32xf32>, vector<32x128xf32>, vector<8x128xf32> -> vector<8x128xf32>
    %211 = vector.broadcast %6 : vector<1x128xf32> to vector<8x128xf32>
    %212 = arith.addf %210, %211 : vector<8x128xf32>
    %213 = vector.extract_strided_slice %212 {offsets = [0, 0], sizes = [8, 96], strides = [1, 1]} : vector<8x128xf32> to vector<8x96xf32>
    %214 = arith.negf %213 : vector<8x96xf32>
    %215 = math.exp %214 : vector<8x96xf32>
    %cst_43 = arith.constant 1.000000e+00 : f32
    %216 = vector.broadcast %cst_43 : f32 to vector<8x96xf32>
    %217 = arith.addf %216, %215 : vector<8x96xf32>
    %218 = arith.divf %216, %217 : vector<8x96xf32>
    %219 = vector.extract_strided_slice %212 {offsets = [0, 96], sizes = [8, 32], strides = [1, 1]} : vector<8x128xf32> to vector<8x32xf32>
    %220 = math.tanh %219 : vector<8x32xf32>
    %221 = vector.extract_strided_slice %218 {offsets = [0, 0], sizes = [8, 32], strides = [1, 1]} : vector<8x96xf32> to vector<8x32xf32>
    %222 = vector.extract_strided_slice %218 {offsets = [0, 32], sizes = [8, 32], strides = [1, 1]} : vector<8x96xf32> to vector<8x32xf32>
    %223 = vector.extract_strided_slice %218 {offsets = [0, 64], sizes = [8, 32], strides = [1, 1]} : vector<8x96xf32> to vector<8x32xf32>
    %224 = arith.mulf %222, %207 : vector<8x32xf32>
    %225 = arith.mulf %221, %220 : vector<8x32xf32>
    %226 = arith.addf %224, %225 : vector<8x32xf32>
    %227 = math.tanh %226 : vector<8x32xf32>
    %228 = arith.mulf %223, %227 : vector<8x32xf32>
    %cst_44 = arith.constant dense<0.000000e+00> : vector<8x128xf32>
    %229 = tpu.matmul %228, %5, %cst_44 {dimension_numbers = #tpu.dot_dimension_numbers<[1], [0], [0], [1], [0, 0, 1, 1], [], []>} : vector<8x32xf32>, vector<32x128xf32>, vector<8x128xf32> -> vector<8x128xf32>
    %230 = vector.broadcast %6 : vector<1x128xf32> to vector<8x128xf32>
    %231 = arith.addf %229, %230 : vector<8x128xf32>
    %232 = vector.extract_strided_slice %231 {offsets = [0, 0], sizes = [8, 96], strides = [1, 1]} : vector<8x128xf32> to vector<8x96xf32>
    %233 = arith.negf %232 : vector<8x96xf32>
    %234 = math.exp %233 : vector<8x96xf32>
    %cst_45 = arith.constant 1.000000e+00 : f32
    %235 = vector.broadcast %cst_45 : f32 to vector<8x96xf32>
    %236 = arith.addf %235, %234 : vector<8x96xf32>
    %237 = arith.divf %235, %236 : vector<8x96xf32>
    %238 = vector.extract_strided_slice %231 {offsets = [0, 96], sizes = [8, 32], strides = [1, 1]} : vector<8x128xf32> to vector<8x32xf32>
    %239 = math.tanh %238 : vector<8x32xf32>
    %240 = vector.extract_strided_slice %237 {offsets = [0, 0], sizes = [8, 32], strides = [1, 1]} : vector<8x96xf32> to vector<8x32xf32>
    %241 = vector.extract_strided_slice %237 {offsets = [0, 32], sizes = [8, 32], strides = [1, 1]} : vector<8x96xf32> to vector<8x32xf32>
    %242 = vector.extract_strided_slice %237 {offsets = [0, 64], sizes = [8, 32], strides = [1, 1]} : vector<8x96xf32> to vector<8x32xf32>
    %243 = arith.mulf %241, %226 : vector<8x32xf32>
    %244 = arith.mulf %240, %239 : vector<8x32xf32>
    %245 = arith.addf %243, %244 : vector<8x32xf32>
    %246 = math.tanh %245 : vector<8x32xf32>
    %247 = arith.mulf %242, %246 : vector<8x32xf32>
    %cst_46 = arith.constant dense<0.000000e+00> : vector<8x128xf32>
    %248 = tpu.matmul %247, %5, %cst_46 {dimension_numbers = #tpu.dot_dimension_numbers<[1], [0], [0], [1], [0, 0, 1, 1], [], []>} : vector<8x32xf32>, vector<32x128xf32>, vector<8x128xf32> -> vector<8x128xf32>
    %249 = vector.broadcast %6 : vector<1x128xf32> to vector<8x128xf32>
    %250 = arith.addf %248, %249 : vector<8x128xf32>
    %251 = vector.extract_strided_slice %250 {offsets = [0, 0], sizes = [8, 96], strides = [1, 1]} : vector<8x128xf32> to vector<8x96xf32>
    %252 = arith.negf %251 : vector<8x96xf32>
    %253 = math.exp %252 : vector<8x96xf32>
    %cst_47 = arith.constant 1.000000e+00 : f32
    %254 = vector.broadcast %cst_47 : f32 to vector<8x96xf32>
    %255 = arith.addf %254, %253 : vector<8x96xf32>
    %256 = arith.divf %254, %255 : vector<8x96xf32>
    %257 = vector.extract_strided_slice %250 {offsets = [0, 96], sizes = [8, 32], strides = [1, 1]} : vector<8x128xf32> to vector<8x32xf32>
    %258 = math.tanh %257 : vector<8x32xf32>
    %259 = vector.extract_strided_slice %256 {offsets = [0, 0], sizes = [8, 32], strides = [1, 1]} : vector<8x96xf32> to vector<8x32xf32>
    %260 = vector.extract_strided_slice %256 {offsets = [0, 32], sizes = [8, 32], strides = [1, 1]} : vector<8x96xf32> to vector<8x32xf32>
    %261 = vector.extract_strided_slice %256 {offsets = [0, 64], sizes = [8, 32], strides = [1, 1]} : vector<8x96xf32> to vector<8x32xf32>
    %262 = arith.mulf %260, %245 : vector<8x32xf32>
    %263 = arith.mulf %259, %258 : vector<8x32xf32>
    %264 = arith.addf %262, %263 : vector<8x32xf32>
    %265 = math.tanh %264 : vector<8x32xf32>
    %266 = arith.mulf %261, %265 : vector<8x32xf32>
    %cst_48 = arith.constant dense<0.000000e+00> : vector<8x128xf32>
    %267 = tpu.matmul %266, %5, %cst_48 {dimension_numbers = #tpu.dot_dimension_numbers<[1], [0], [0], [1], [0, 0, 1, 1], [], []>} : vector<8x32xf32>, vector<32x128xf32>, vector<8x128xf32> -> vector<8x128xf32>
    %268 = vector.broadcast %6 : vector<1x128xf32> to vector<8x128xf32>
    %269 = arith.addf %267, %268 : vector<8x128xf32>
    %270 = vector.extract_strided_slice %269 {offsets = [0, 0], sizes = [8, 96], strides = [1, 1]} : vector<8x128xf32> to vector<8x96xf32>
    %271 = arith.negf %270 : vector<8x96xf32>
    %272 = math.exp %271 : vector<8x96xf32>
    %cst_49 = arith.constant 1.000000e+00 : f32
    %273 = vector.broadcast %cst_49 : f32 to vector<8x96xf32>
    %274 = arith.addf %273, %272 : vector<8x96xf32>
    %275 = arith.divf %273, %274 : vector<8x96xf32>
    %276 = vector.extract_strided_slice %269 {offsets = [0, 96], sizes = [8, 32], strides = [1, 1]} : vector<8x128xf32> to vector<8x32xf32>
    %277 = math.tanh %276 : vector<8x32xf32>
    %278 = vector.extract_strided_slice %275 {offsets = [0, 0], sizes = [8, 32], strides = [1, 1]} : vector<8x96xf32> to vector<8x32xf32>
    %279 = vector.extract_strided_slice %275 {offsets = [0, 32], sizes = [8, 32], strides = [1, 1]} : vector<8x96xf32> to vector<8x32xf32>
    %280 = vector.extract_strided_slice %275 {offsets = [0, 64], sizes = [8, 32], strides = [1, 1]} : vector<8x96xf32> to vector<8x32xf32>
    %281 = arith.mulf %279, %264 : vector<8x32xf32>
    %282 = arith.mulf %278, %277 : vector<8x32xf32>
    %283 = arith.addf %281, %282 : vector<8x32xf32>
    %284 = math.tanh %283 : vector<8x32xf32>
    %285 = arith.mulf %280, %284 : vector<8x32xf32>
    %286 = tpu.concatenate %190, %209, %228, %247, %266, %285 in 0 : vector<8x32xf32>, vector<8x32xf32>, vector<8x32xf32>, vector<8x32xf32>, vector<8x32xf32>, vector<8x32xf32> -> vector<48x32xf32>
    %c0_50 = arith.constant 0 : index
    %c0_51 = arith.constant 0 : index
    %287 = vector.load %arg10[%c0_50, %c0_51] : memref<32x4xf32, #tpu.memory_space<vmem>>, vector<32x4xf32>
    %cst_52 = arith.constant dense<0.000000e+00> : vector<48x4xf32>
    %288 = tpu.matmul %286, %287, %cst_52 {dimension_numbers = #tpu.dot_dimension_numbers<[1], [0], [0], [1], [0, 0, 1, 1], [], []>} : vector<48x32xf32>, vector<32x4xf32>, vector<48x4xf32> -> vector<48x4xf32>
    %c0_53 = arith.constant 0 : index
    %c0_54 = arith.constant 0 : index
    %289 = vector.load %arg11[%c0_53, %c0_54] : memref<1x4xf32, #tpu.memory_space<vmem>>, vector<1x4xf32>
    %290 = vector.broadcast %289 : vector<1x4xf32> to vector<48x4xf32>
    %291 = arith.addf %288, %290 : vector<48x4xf32>
    %c0_55 = arith.constant 0 : index
    %c0_56 = arith.constant 0 : index
    %292 = vector.load %arg12[%c0_55, %c0_56] : memref<48x4xf32, #tpu.memory_space<vmem>>, vector<48x4xf32>
    tpu.vector_store %arg12[%c0_55, %c0_56], %291 {strides = array<i32>} : memref<48x4xf32, #tpu.memory_space<vmem>>, vector<48x4xf32>,
    return
  }
}

</mosaic_0001>

<llo_original>
// kernel: tpu_custom_call.1
$region0: #{tpu_custom_call.1}
  #allocation0 [shape = 'u32[]', space=smem, size = 0x4, offset = 0x4, fixed_abs, tag = 'smem constant byte address 0x4 - core index']
  #allocation1 [shape = 'u32[144,128]{1,0:T(1,128)}', space=vmem, size = 0x12000, scoped, tag = 'internal scratch']
  %s0 = inlined_call_operand.vmem [shape: f32[64,4], index: 0, kind: input, shape index: {}]
  %s1 = inlined_call_operand.hbm [shape: f32[4,128], index: 1, kind: input, shape index: {}]
  %s2 = inlined_call_operand.vmem [shape: f32[32,128], index: 2, kind: input, shape index: {}]
  %s3 = inlined_call_operand.vmem [shape: f32[1,128], index: 3, kind: input, shape index: {}]
  %s4 = inlined_call_operand.vmem [shape: f32[32,128], index: 4, kind: input, shape index: {}]
  %s5 = inlined_call_operand.vmem [shape: f32[1,128], index: 5, kind: input, shape index: {}]
  %s6 = inlined_call_operand.vmem [shape: f32[32,128], index: 6, kind: input, shape index: {}]
  %s7 = inlined_call_operand.hbm [shape: f32[1,128], index: 7, kind: input, shape index: {}]
  %s8 = inlined_call_operand.vmem [shape: f32[32,64], index: 8, kind: input, shape index: {}]
  %s9 = inlined_call_operand.vmem [shape: f32[1,64], index: 9, kind: input, shape index: {}]
  %s10 = inlined_call_operand.vmem [shape: f32[32,4], index: 10, kind: input, shape index: {}]
  %s11 = inlined_call_operand.vmem [shape: f32[1,4], index: 11, kind: input, shape index: {}]
  %s12 = inlined_call_operand.vmem [shape: f32[48,4], index: 12, kind: output, shape index: {}]
  %s13 = sld [smem:[#allocation0]]
  $region66: #{tpu_custom_call.1} parent=0
    _
  %s15 = ssub.s32 1, %s13
  %s16 = scalar_select 0, %s15, %s13
  $region1: #{tpu_custom_call.1} parent=0
    #allocation2 [shape = 'u8[2048]{0}', space=vmem, size = 0x800, scoped, tag = 'input window, operand 1, single buffered']
    #allocation3 [shape = 's32[1]{0}', space=sflag, size = 0x4, scoped, tag = 'scoped memory for tpu_custom_call.1']
    #allocation4 [shape = 'u8[512]{0}', space=vmem, size = 0x400, scoped, tag = 'input window, operand 7, single buffered']
    #allocation5 [shape = 's32[1]{0}', space=sflag, size = 0x4, scoped, tag = 'scoped memory for tpu_custom_call.1']
    %17 = vsyncpa [#allocation3], 0
    %18 = vsyncpa [#allocation5], 0
    // Predicated region
    $region2: #{tpu_custom_call.1} parent=1 // pred_check
      _
    $region3: #{tpu_custom_call.1} parent=1 // pred_check_branch
      %20 = sbr.rel (0) target = $region5
    $region4: #{tpu_custom_call.1} parent=1 // pred_region
      _
    $region5: #{tpu_custom_call.1} parent=1 // pred_fallthru
      _
    // Predicated region
    $region6: #{tpu_custom_call.1} parent=1 // pred_check
      _
    $region7: #{tpu_custom_call.1} parent=1 // pred_check_branch
      %22 = sbr.rel (0) target = $region9
    $region8: #{tpu_custom_call.1} parent=1 // pred_region
      %s24 = ssub.s32 64, 64
      %25 = vsyncadd [#allocation3], %s24
      %s27 = sshll.u32 [#allocation2], 4
      %s28 = int_to_ptr.vmem [resolvable:$true] %s27
      %30 = dma.hbm_to_vmem [thread:$0]  %s1, 64, %s28, [#allocation3]
    $region9: #{tpu_custom_call.1} parent=1 // pred_fallthru
      _
    // Predicated region
    $region10: #{tpu_custom_call.1} parent=1 // pred_check
      _
    $region11: #{tpu_custom_call.1} parent=1 // pred_check_branch
      %32 = sbr.rel (0) target = $region13
    $region12: #{tpu_custom_call.1} parent=1 // pred_region
      _
    $region13: #{tpu_custom_call.1} parent=1 // pred_fallthru
      _
    // Predicated region
    $region14: #{tpu_custom_call.1} parent=1 // pred_check
      _
    $region15: #{tpu_custom_call.1} parent=1 // pred_check_branch
      %34 = sbr.rel (0) target = $region17
    $region16: #{tpu_custom_call.1} parent=1 // pred_region
      _
    $region17: #{tpu_custom_call.1} parent=1 // pred_fallthru
      _
    // Predicated region
    $region18: #{tpu_custom_call.1} parent=1 // pred_check
      _
    $region19: #{tpu_custom_call.1} parent=1 // pred_check_branch
      %36 = sbr.rel (0) target = $region21
    $region20: #{tpu_custom_call.1} parent=1 // pred_region
      _
    $region21: #{tpu_custom_call.1} parent=1 // pred_fallthru
      _
    // Predicated region
    $region22: #{tpu_custom_call.1} parent=1 // pred_check
      _
    $region23: #{tpu_custom_call.1} parent=1 // pred_check_branch
      %38 = sbr.rel (0) target = $region25
    $region24: #{tpu_custom_call.1} parent=1 // pred_region
      _
    $region25: #{tpu_custom_call.1} parent=1 // pred_fallthru
      _
    // Predicated region
    $region26: #{tpu_custom_call.1} parent=1 // pred_check
      _
    $region27: #{tpu_custom_call.1} parent=1 // pred_check_branch
      %40 = sbr.rel (0) target = $region29
    $region28: #{tpu_custom_call.1} parent=1 // pred_region
      _
    $region29: #{tpu_custom_call.1} parent=1 // pred_fallthru
      _
    // Predicated region
    $region30: #{tpu_custom_call.1} parent=1 // pred_check
      _
    $region31: #{tpu_custom_call.1} parent=1 // pred_check_branch
      %42 = sbr.rel (0) target = $region33
    $region32: #{tpu_custom_call.1} parent=1 // pred_region
      %s44 = ssub.s32 16, 16
      %45 = vsyncadd [#allocation5], %s44
      %s47 = sshll.u32 [#allocation4], 4
      %s48 = int_to_ptr.vmem [resolvable:$true] %s47
      %50 = dma.hbm_to_vmem [thread:$0]  %s7, 16, %s48, [#allocation5]
    $region33: #{tpu_custom_call.1} parent=1 // pred_fallthru
      _
    // Predicated region
    $region34: #{tpu_custom_call.1} parent=1 // pred_check
      _
    $region35: #{tpu_custom_call.1} parent=1 // pred_check_branch
      %52 = sbr.rel (0) target = $region37
    $region36: #{tpu_custom_call.1} parent=1 // pred_region
      _
    $region37: #{tpu_custom_call.1} parent=1 // pred_fallthru
      _
    // Predicated region
    $region38: #{tpu_custom_call.1} parent=1 // pred_check
      _
    $region39: #{tpu_custom_call.1} parent=1 // pred_check_branch
      %54 = sbr.rel (0) target = $region41
    $region40: #{tpu_custom_call.1} parent=1 // pred_region
      _
    $region41: #{tpu_custom_call.1} parent=1 // pred_fallthru
      _
    // Predicated region
    $region42: #{tpu_custom_call.1} parent=1 // pred_check
      _
    $region43: #{tpu_custom_call.1} parent=1 // pred_check_branch
      %56 = sbr.rel (0) target = $region45
    $region44: #{tpu_custom_call.1} parent=1 // pred_region
      _
    $region45: #{tpu_custom_call.1} parent=1 // pred_fallthru
      _
    // Predicated region
    $region46: #{tpu_custom_call.1} parent=1 // pred_check
      _
    $region47: #{tpu_custom_call.1} parent=1 // pred_check_branch
      %58 = sbr.rel (0) target = $region49
    $region48: #{tpu_custom_call.1} parent=1 // pred_region
      _
    $region49: #{tpu_custom_call.1} parent=1 // pred_fallthru
      _
    // Predicated region
    $region50: #{tpu_custom_call.1} parent=1 // pred_check
      _
    $region51: #{tpu_custom_call.1} parent=1 // pred_check_branch
      %60 = sbr.rel (0) target = $region53
    $region52: #{tpu_custom_call.1} parent=1 // pred_region
      %61 = dma.done [#allocation3], 64
    $region53: #{tpu_custom_call.1} parent=1 // pred_fallthru
      _
    // Predicated region
    $region54: #{tpu_custom_call.1} parent=1 // pred_check
      _
    $region55: #{tpu_custom_call.1} parent=1 // pred_check_branch
      %63 = sbr.rel (0) target = $region57
    $region56: #{tpu_custom_call.1} parent=1 // pred_region
      %64 = dma.done [#allocation5], 16
    $region57: #{tpu_custom_call.1} parent=1 // pred_fallthru
      _
    %v65 = vld [vmem:[#allocation2] sm:$0xf]
    %v66 = vld [vmem:[%s2] sm:$0xff]
    %v67 = vld [vmem:[%s2 + $0x8] sm:$0xff]
    %v68 = vld [vmem:[%s2 + $0x10] sm:$0xff]
    %v69 = vld [vmem:[%s2 + $0x18] sm:$0xff]
    %v70 = vld [vmem:[%s3] sm:$0x1]
    %v71 = vld [vmem:[%s4] sm:$0xff]
    %v72 = vld [vmem:[%s4 + $0x8] sm:$0xff]
    %v73 = vld [vmem:[%s4 + $0x10] sm:$0xff]
    %v74 = vld [vmem:[%s4 + $0x18] sm:$0xff]
    %v75 = vld [vmem:[%s5] sm:$0x1]
    %v76 = vld [vmem:[%s6] sm:$0xff]
    %v77 = vld [vmem:[%s6 + $0x8] sm:$0xff]
    %v78 = vld [vmem:[%s6 + $0x10] sm:$0xff]
    %v79 = vld [vmem:[%s6 + $0x18] sm:$0xff]
    %v80 = vld [vmem:[#allocation4] sm:$0x1]
    %v81 = vld [vmem:[%s0] sm:$0xff]
    %v82 = vld [vmem:[%s0 + $0x8] sm:$0xff]
    %v83 = vld [vmem:[%s0 + $0x10] sm:$0xff]
    %v84 = vld [vmem:[%s0 + $0x18] sm:$0xff]
    %v85 = vld [vmem:[%s0 + $0x20] sm:$0xff]
    %v86 = vld [vmem:[%s0 + $0x28] sm:$0xff]
    %v87 = vld [vmem:[%s0 + $0x30] sm:$0xff]
    %v88 = vld [vmem:[%s0 + $0x38] sm:$0xff]
    %v90 = vlaneseq
    %v91 = vshrl.u32 %v90, 7
    %v92 = vsub.s32 0, %v91
    %v93 = vrot.slane %v70, %v92
    %vm95 = vcmask 31744
    %v97 = vsel %vm95, %v81, 0
    %v100 = vsel %vm95, %v82, 0
    %v103 = vsel %vm95, %v83, 0
    %v106 = vsel %vm95, %v84, 0
    %v109 = vsel %vm95, %v85, 0
    %v112 = vsel %vm95, %v86, 0
    %v115 = vsel %vm95, %v87, 0
    %v118 = vsel %vm95, %v88, 0
    %vm120 = vcmask 1043456
    %v122 = vsel %vm120, %v65, 0
    %124 = vmatprep.subr.mxu0 0.0
    %125 = vmatpush1.msra.mxu0 %v122
    %126 = vmatprep.subr.mxu0 0.0
    %127 = vmatpush1.msra.mxu0 0.0
    %128 = vmatprep.subr.mxu0 0.0
    %129 = vmatpush1.msra.mxu0 0.0
    %130 = vmatprep.subr.mxu0 0.0
    %131 = vmatpush1.msra.mxu0 0.0
    %132 = vmatprep.subr.mxu0 0.0
    %133 = vmatpush1.msra.mxu0 0.0
    %134 = vmatprep.subr.mxu0 0.0
    %135 = vmatpush1.msra.mxu0 0.0
    %136 = vmatprep.subr.mxu0 0.0
    %137 = vmatpush1.msra.mxu0 0.0
    %138 = vmatprep.subr.mxu0 0.0
    %139 = vmatpush1.msra.mxu0 0.0
    %140 = vmatprep.subr.mxu0 0.0
    %141 = vmatpush1.msra.mxu0 0.0
    %142 = vmatprep.subr.mxu0 0.0
    %143 = vmatpush1.msra.mxu0 0.0
    %144 = vmatprep.subr.mxu0 0.0
    %145 = vmatpush1.msra.mxu0 0.0
    %146 = vmatprep.subr.mxu0 0.0
    %147 = vmatpush1.msra.mxu0 0.0
    %148 = vmatprep.subr.mxu0 0.0
    %149 = vmatpush1.msra.mxu0 0.0
    %150 = vmatprep.subr.mxu0 0.0
    %151 = vmatpush1.msra.mxu0 0.0
    %152 = vmatprep.subr.mxu0 0.0
    %153 = vmatpush1.msra.mxu0 0.0
    %154 = vmatprep.subr.mxu0 0.0
    %155 = vmatpush1.msra.mxu0 0.0
    %156 = vmatprep.subr.mxu0 0.0
    %157 = vmatpush1.msra.mxu0 0.0
    %158 = vmatprep.subr.mxu0 0.0
    %159 = vmatpush1.msra.mxu0 0.0
    %160 = vmatprep.subr.mxu0 0.0
    %161 = vmatpush1.msra.mxu0 0.0
    %162 = vmatprep.subr.mxu0 0.0
    %163 = vmatpush1.msra.mxu0 0.0
    %164 = vmatprep.subr.mxu0 0.0
    %165 = vmatpush1.msra.mxu0 0.0
    %166 = vmatprep.subr.mxu0 0.0
    %167 = vmatpush1.msra.mxu0 0.0
    %168 = vmatprep.subr.mxu0 0.0
    %169 = vmatpush1.msra.mxu0 0.0
    %170 = vmatprep.subr.mxu0 0.0
    %171 = vmatpush1.msra.mxu0 0.0
    %172 = vmatprep.subr.mxu0 0.0
    %173 = vmatpush1.msra.mxu0 0.0
    %174 = vmatprep.subr.mxu0 0.0
    %175 = vmatpush1.msra.mxu0 0.0
    %176 = vmatprep.subr.mxu0 0.0
    %177 = vmatpush1.msra.mxu0 0.0
    %178 = vmatprep.subr.mxu0 0.0
    %179 = vmatpush1.msra.mxu0 0.0
    %180 = vmatprep.subr.mxu0 0.0
    %181 = vmatpush1.msra.mxu0 0.0
    %182 = vmatprep.subr.mxu0 0.0
    %183 = vmatpush1.msra.mxu0 0.0
    %184 = vmatprep.subr.mxu0 0.0
    %185 = vmatpush1.msra.mxu0 0.0
    %186 = vmatprep.subr.mxu0 0.0
    %187 = vmatpush1.msra.mxu0 0.0
    %188 = vmatprep.mubr.f32.mxu0 0.0
    %189 = vmatmul.mubr.f32.gmra.mrb[0].mxu0 %v97
    %v190 = vpop.f32.mrb[0].mxu0
    %v191 = vadd.f32 %v93, %v190
    %v192 = vpop.f32.mrb[0].mxu0
    %193 = vmatprep.mubr.f32.mxu0 0.0
    %194 = vmatmul.mubr.f32.gmra.mrb[0].mxu0 %v100
    %v195 = vpop.f32.mrb[0].mxu0
    %v196 = vadd.f32 %v93, %v195
    %v197 = vpop.f32.mrb[0].mxu0
    %198 = vmatprep.mubr.f32.mxu0 0.0
    %199 = vmatmul.mubr.f32.gmra.mrb[0].mxu0 %v103
    %v200 = vpop.f32.mrb[0].mxu0
    %v201 = vadd.f32 %v93, %v200
    %v202 = vpop.f32.mrb[0].mxu0
    %203 = vmatprep.mubr.f32.mxu0 0.0
    %204 = vmatmul.mubr.f32.gmra.mrb[0].mxu0 %v106
    %v205 = vpop.f32.mrb[0].mxu0
    %v206 = vadd.f32 %v93, %v205
    %v207 = vpop.f32.mrb[0].mxu0
    %208 = vmatprep.mubr.f32.mxu0 0.0
    %209 = vmatmul.mubr.f32.gmra.mrb[0].mxu0 %v109
    %v210 = vpop.f32.mrb[0].mxu0
    %v211 = vadd.f32 %v93, %v210
    %v212 = vpop.f32.mrb[0].mxu0
    %213 = vmatprep.mubr.f32.mxu0 0.0
    %214 = vmatmul.mubr.f32.gmra.mrb[0].mxu0 %v112
    %v215 = vpop.f32.mrb[0].mxu0
    %v216 = vadd.f32 %v93, %v215
    %v217 = vpop.f32.mrb[0].mxu0
    %218 = vmatprep.mubr.f32.mxu0 0.0
    %219 = vmatmul.mubr.f32.gmra.mrb[0].mxu0 %v115
    %v220 = vpop.f32.mrb[0].mxu0
    %v221 = vadd.f32 %v93, %v220
    %v222 = vpop.f32.mrb[0].mxu0
    %223 = vmatprep.mubr.f32.mxu0 0.0
    %224 = vmatmul.mubr.f32.gmra.mrb[0].mxu0 %v118
    %v225 = vpop.f32.mrb[0].mxu0
    %v226 = vadd.f32 %v93, %v225
    %v227 = vpop.f32.mrb[0].mxu0
    %228 = vdwg.mxu0
    %vm229 = vcmask 261120
    %v231 = vsel %vm229, 0.0, 0
    %233 = vmatprep.subr.mxu0 0.0
    %234 = vmatpush1.msra.mxu0 %v66
    %235 = vmatprep.subr.mxu0 0.0
    %236 = vmatpush1.msra.mxu0 %v67
    %237 = vmatprep.subr.mxu0 0.0
    %238 = vmatpush1.msra.mxu0 %v68
    %239 = vmatprep.subr.mxu0 0.0
    %240 = vmatpush1.msra.mxu0 %v69
    %241 = vmatprep.subr.mxu0 0.0
    %242 = vmatpush1.msra.mxu0 0.0
    %243 = vmatprep.subr.mxu0 0.0
    %244 = vmatpush1.msra.mxu0 0.0
    %245 = vmatprep.subr.mxu0 0.0
    %246 = vmatpush1.msra.mxu0 0.0
    %247 = vmatprep.subr.mxu0 0.0
    %248 = vmatpush1.msra.mxu0 0.0
    %249 = vmatprep.subr.mxu0 0.0
    %250 = vmatpush1.msra.mxu0 0.0
    %251 = vmatprep.subr.mxu0 0.0
    %252 = vmatpush1.msra.mxu0 0.0
    %253 = vmatprep.subr.mxu0 0.0
    %254 = vmatpush1.msra.mxu0 0.0
    %255 = vmatprep.subr.mxu0 0.0
    %256 = vmatpush1.msra.mxu0 0.0
    %257 = vmatprep.subr.mxu0 0.0
    %258 = vmatpush1.msra.mxu0 0.0
    %259 = vmatprep.subr.mxu0 0.0
    %260 = vmatpush1.msra.mxu0 0.0
    %261 = vmatprep.subr.mxu0 0.0
    %262 = vmatpush1.msra.mxu0 0.0
    %263 = vmatprep.subr.mxu0 0.0
    %264 = vmatpush1.msra.mxu0 0.0
    %265 = vmatprep.subr.mxu0 0.0
    %266 = vmatpush1.msra.mxu0 0.0
    %267 = vmatprep.subr.mxu0 0.0
    %268 = vmatpush1.msra.mxu0 0.0
    %269 = vmatprep.subr.mxu0 0.0
    %270 = vmatpush1.msra.mxu0 0.0
    %271 = vmatprep.subr.mxu0 0.0
    %272 = vmatpush1.msra.mxu0 0.0
    %273 = vmatprep.subr.mxu0 0.0
    %274 = vmatpush1.msra.mxu0 0.0
    %275 = vmatprep.subr.mxu0 0.0
    %276 = vmatpush1.msra.mxu0 0.0
    %277 = vmatprep.subr.mxu0 0.0
    %278 = vmatpush1.msra.mxu0 0.0
    %279 = vmatprep.subr.mxu0 0.0
    %280 = vmatpush1.msra.mxu0 0.0
    %281 = vmatprep.subr.mxu0 0.0
    %282 = vmatpush1.msra.mxu0 0.0
    %283 = vmatprep.subr.mxu0 0.0
    %284 = vmatpush1.msra.mxu0 0.0
    %285 = vmatprep.subr.mxu0 0.0
    %286 = vmatpush1.msra.mxu0 0.0
    %287 = vmatprep.subr.mxu0 0.0
    %288 = vmatpush1.msra.mxu0 0.0
    %289 = vmatprep.subr.mxu0 0.0
    %290 = vmatpush1.msra.mxu0 0.0
    %291 = vmatprep.subr.mxu0 0.0
    %292 = vmatpush1.msra.mxu0 0.0
    %293 = vmatprep.subr.mxu0 0.0
    %294 = vmatpush1.msra.mxu0 0.0
    %295 = vmatprep.subr.mxu0 0.0
    %296 = vmatpush1.msra.mxu0 0.0
    %297 = vmatprep.mubr.f32.mxu0 0.0
    %298 = vmatmul.mubr.f32.gmra.mrb[0].mxu0 %v231
    %v299 = vpop.f32.mrb[0].mxu0
    %v300 = vadd.f32 0.0, %v299
    %v301 = vpop.f32.mrb[0].mxu0
    %302 = vdwg.mxu0
    %v303 = vadd.f32 %v191, %v300
    %v304 = vxor.u32 %v303, 2147483648
    %v305 = vmul.f32 %v304, 1.442695
    %v306 = vpow.pop %v305
    %v307 = vadd.f32 %v306, 1.0
    %v308 = vrcp.pop %v307
    %v309 = vmul.f32 1.0, %v308
    %v310 = vtanh.pop %v303
    %v311 = vmul.f32 %v309, 0.0
    %313 = vrot.lane.b32.xlu0 %v310, 32
    %v314 = vpop.permute.xlu0 %313
    %v316 = vmul.f32 %v309, %v314
    %318 = vrot.lane.b32.xlu0 %v316, 32
    %v319 = vpop.permute.xlu0 %318
    %v321 = vadd.f32 %v311, %v319
    %v322 = vtanh.pop %v321
    %324 = vrot.lane.b32.xlu0 %v322, 32
    %v325 = vpop.permute.xlu0 %324
    %v327 = vmul.f32 %v309, %v325
    %329 = vrot.lane.b32.xlu0 %v327, 64
    %v330 = vpop.permute.xlu0 %329
    %v331 = vsel %vm229, %v330, 0
    %333 = vmatprep.subr.mxu0 0.0
    %334 = vmatpush1.msra.mxu0 %v66
    %335 = vmatprep.subr.mxu0 0.0
    %336 = vmatpush1.msra.mxu0 %v67
    %337 = vmatprep.subr.mxu0 0.0
    %338 = vmatpush1.msra.mxu0 %v68
    %339 = vmatprep.subr.mxu0 0.0
    %340 = vmatpush1.msra.mxu0 %v69
    %341 = vmatprep.subr.mxu0 0.0
    %342 = vmatpush1.msra.mxu0 0.0
    %343 = vmatprep.subr.mxu0 0.0
    %344 = vmatpush1.msra.mxu0 0.0
    %345 = vmatprep.subr.mxu0 0.0
    %346 = vmatpush1.msra.mxu0 0.0
    %347 = vmatprep.subr.mxu0 0.0
    %348 = vmatpush1.msra.mxu0 0.0
    %349 = vmatprep.subr.mxu0 0.0
    %350 = vmatpush1.msra.mxu0 0.0
    %351 = vmatprep.subr.mxu0 0.0
    %352 = vmatpush1.msra.mxu0 0.0
    %353 = vmatprep.subr.mxu0 0.0
    %354 = vmatpush1.msra.mxu0 0.0
    %355 = vmatprep.subr.mxu0 0.0
    %356 = vmatpush1.msra.mxu0 0.0
    %357 = vmatprep.subr.mxu0 0.0
    %358 = vmatpush1.msra.mxu0 0.0
    %359 = vmatprep.subr.mxu0 0.0
    %360 = vmatpush1.msra.mxu0 0.0
    %361 = vmatprep.subr.mxu0 0.0
    %362 = vmatpush1.msra.mxu0 0.0
    %363 = vmatprep.subr.mxu0 0.0
    %364 = vmatpush1.msra.mxu0 0.0
    %365 = vmatprep.subr.mxu0 0.0
    %366 = vmatpush1.msra.mxu0 0.0
    %367 = vmatprep.subr.mxu0 0.0
    %368 = vmatpush1.msra.mxu0 0.0
    %369 = vmatprep.subr.mxu0 0.0
    %370 = vmatpush1.msra.mxu0 0.0
    %371 = vmatprep.subr.mxu0 0.0
    %372 = vmatpush1.msra.mxu0 0.0
    %373 = vmatprep.subr.mxu0 0.0
    %374 = vmatpush1.msra.mxu0 0.0
    %375 = vmatprep.subr.mxu0 0.0
    %376 = vmatpush1.msra.mxu0 0.0
    %377 = vmatprep.subr.mxu0 0.0
    %378 = vmatpush1.msra.mxu0 0.0
    %379 = vmatprep.subr.mxu0 0.0
    %380 = vmatpush1.msra.mxu0 0.0
    %381 = vmatprep.subr.mxu0 0.0
    %382 = vmatpush1.msra.mxu0 0.0
    %383 = vmatprep.subr.mxu0 0.0
    %384 = vmatpush1.msra.mxu0 0.0
    %385 = vmatprep.subr.mxu0 0.0
    %386 = vmatpush1.msra.mxu0 0.0
    %387 = vmatprep.subr.mxu0 0.0
    %388 = vmatpush1.msra.mxu0 0.0
    %389 = vmatprep.subr.mxu0 0.0
    %390 = vmatpush1.msra.mxu0 0.0
    %391 = vmatprep.subr.mxu0 0.0
    %392 = vmatpush1.msra.mxu0 0.0
    %393 = vmatprep.subr.mxu0 0.0
    %394 = vmatpush1.msra.mxu0 0.0
    %395 = vmatprep.subr.mxu0 0.0
    %396 = vmatpush1.msra.mxu0 0.0
    %397 = vmatprep.mubr.f32.mxu0 0.0
    %398 = vmatmul.mubr.f32.gmra.mrb[0].mxu0 %v331
    %v399 = vpop.f32.mrb[0].mxu0
    %v400 = vadd.f32 0.0, %v399
    %v401 = vpop.f32.mrb[0].mxu0
    %402 = vdwg.mxu0
    %v403 = vadd.f32 %v196, %v400
    %v404 = vxor.u32 %v403, 2147483648
    %v405 = vmul.f32 %v404, 1.442695
    %v406 = vpow.pop %v405
    %v407 = vadd.f32 %v406, 1.0
    %v408 = vrcp.pop %v407
    %v409 = vmul.f32 1.0, %v408
    %v410 = vtanh.pop %v403
    %v411 = vmul.f32 %v409, %v321
    %413 = vrot.lane.b32.xlu0 %v410, 32
    %v414 = vpop.permute.xlu0 %413
    %v416 = vmul.f32 %v409, %v414
    %418 = vrot.lane.b32.xlu0 %v416, 32
    %v419 = vpop.permute.xlu0 %418
    %v421 = vadd.f32 %v411, %v419
    %v422 = vtanh.pop %v421
    %424 = vrot.lane.b32.xlu0 %v422, 32
    %v425 = vpop.permute.xlu0 %424
    %v427 = vmul.f32 %v409, %v425
    %429 = vrot.lane.b32.xlu0 %v427, 64
    %v430 = vpop.permute.xlu0 %429
    %v431 = vsel %vm229, %v430, 0
    %433 = vmatprep.subr.mxu0 0.0
    %434 = vmatpush1.msra.mxu0 %v66
    %435 = vmatprep.subr.mxu0 0.0
    %436 = vmatpush1.msra.mxu0 %v67
    %437 = vmatprep.subr.mxu0 0.0
    %438 = vmatpush1.msra.mxu0 %v68
    %439 = vmatprep.subr.mxu0 0.0
    %440 = vmatpush1.msra.mxu0 %v69
    %441 = vmatprep.subr.mxu0 0.0
    %442 = vmatpush1.msra.mxu0 0.0
    %443 = vmatprep.subr.mxu0 0.0
    %444 = vmatpush1.msra.mxu0 0.0
    %445 = vmatprep.subr.mxu0 0.0
    %446 = vmatpush1.msra.mxu0 0.0
    %447 = vmatprep.subr.mxu0 0.0
    %448 = vmatpush1.msra.mxu0 0.0
    %449 = vmatprep.subr.mxu0 0.0
    %450 = vmatpush1.msra.mxu0 0.0
    %451 = vmatprep.subr.mxu0 0.0
    %452 = vmatpush1.msra.mxu0 0.0
    %453 = vmatprep.subr.mxu0 0.0
    %454 = vmatpush1.msra.mxu0 0.0
    %455 = vmatprep.subr.mxu0 0.0
    %456 = vmatpush1.msra.mxu0 0.0
    %457 = vmatprep.subr.mxu0 0.0
    %458 = vmatpush1.msra.mxu0 0.0
    %459 = vmatprep.subr.mxu0 0.0
    %460 = vmatpush1.msra.mxu0 0.0
    %461 = vmatprep.subr.mxu0 0.0
    %462 = vmatpush1.msra.mxu0 0.0
    %463 = vmatprep.subr.mxu0 0.0
    %464 = vmatpush1.msra.mxu0 0.0
    %465 = vmatprep.subr.mxu0 0.0
    %466 = vmatpush1.msra.mxu0 0.0
    %467 = vmatprep.subr.mxu0 0.0
    %468 = vmatpush1.msra.mxu0 0.0
    %469 = vmatprep.subr.mxu0 0.0
    %470 = vmatpush1.msra.mxu0 0.0
    %471 = vmatprep.subr.mxu0 0.0
    %472 = vmatpush1.msra.mxu0 0.0
    %473 = vmatprep.subr.mxu0 0.0
    %474 = vmatpush1.msra.mxu0 0.0
    %475 = vmatprep.subr.mxu0 0.0
    %476 = vmatpush1.msra.mxu0 0.0
    %477 = vmatprep.subr.mxu0 0.0
    %478 = vmatpush1.msra.mxu0 0.0
    %479 = vmatprep.subr.mxu0 0.0
    %480 = vmatpush1.msra.mxu0 0.0
    %481 = vmatprep.subr.mxu0 0.0
    %482 = vmatpush1.msra.mxu0 0.0
    %483 = vmatprep.subr.mxu0 0.0
    %484 = vmatpush1.msra.mxu0 0.0
    %485 = vmatprep.subr.mxu0 0.0
    %486 = vmatpush1.msra.mxu0 0.0
    %487 = vmatprep.subr.mxu0 0.0
    %488 = vmatpush1.msra.mxu0 0.0
    %489 = vmatprep.subr.mxu0 0.0
    %490 = vmatpush1.msra.mxu0 0.0
    %491 = vmatprep.subr.mxu0 0.0
    %492 = vmatpush1.msra.mxu0 0.0
    %493 = vmatprep.subr.mxu0 0.0
    %494 = vmatpush1.msra.mxu0 0.0
    %495 = vmatprep.subr.mxu0 0.0
    %496 = vmatpush1.msra.mxu0 0.0
    %497 = vmatprep.mubr.f32.mxu0 0.0
    %498 = vmatmul.mubr.f32.gmra.mrb[0].mxu0 %v431
    %v499 = vpop.f32.mrb[0].mxu0
    %v500 = vadd.f32 0.0, %v499
    %v501 = vpop.f32.mrb[0].mxu0
    %502 = vdwg.mxu0
    %v503 = vadd.f32 %v201, %v500
    %v504 = vxor.u32 %v503, 2147483648
    %v505 = vmul.f32 %v504, 1.442695
    %v506 = vpow.pop %v505
    %v507 = vadd.f32 %v506, 1.0
    %v508 = vrcp.pop %v507
    %v509 = vmul.f32 1.0, %v508
    %v510 = vtanh.pop %v503
    %v511 = vmul.f32 %v509, %v421
    %513 = vrot.lane.b32.xlu0 %v510, 32
    %v514 = vpop.permute.xlu0 %513
    %v516 = vmul.f32 %v509, %v514
    %518 = vrot.lane.b32.xlu0 %v516, 32
    %v519 = vpop.permute.xlu0 %518
    %v521 = vadd.f32 %v511, %v519
    %v522 = vtanh.pop %v521
    %524 = vrot.lane.b32.xlu0 %v522, 32
    %v525 = vpop.permute.xlu0 %524
    %v527 = vmul.f32 %v509, %v525
    %529 = vrot.lane.b32.xlu0 %v527, 64
    %v530 = vpop.permute.xlu0 %529
    %v531 = vsel %vm229, %v530, 0
    %533 = vmatprep.subr.mxu0 0.0
    %534 = vmatpush1.msra.mxu0 %v66
    %535 = vmatprep.subr.mxu0 0.0
    %536 = vmatpush1.msra.mxu0 %v67
    %537 = vmatprep.subr.mxu0 0.0
    %538 = vmatpush1.msra.mxu0 %v68
    %539 = vmatprep.subr.mxu0 0.0
    %540 = vmatpush1.msra.mxu0 %v69
    %541 = vmatprep.subr.mxu0 0.0
    %542 = vmatpush1.msra.mxu0 0.0
    %543 = vmatprep.subr.mxu0 0.0
    %544 = vmatpush1.msra.mxu0 0.0
    %545 = vmatprep.subr.mxu0 0.0
    %546 = vmatpush1.msra.mxu0 0.0
    %547 = vmatprep.subr.mxu0 0.0
    %548 = vmatpush1.msra.mxu0 0.0
    %549 = vmatprep.subr.mxu0 0.0
    %550 = vmatpush1.msra.mxu0 0.0
    %551 = vmatprep.subr.mxu0 0.0
    %552 = vmatpush1.msra.mxu0 0.0
    %553 = vmatprep.subr.mxu0 0.0
    %554 = vmatpush1.msra.mxu0 0.0
    %555 = vmatprep.subr.mxu0 0.0
    %556 = vmatpush1.msra.mxu0 0.0
    %557 = vmatprep.subr.mxu0 0.0
    %558 = vmatpush1.msra.mxu0 0.0
    %559 = vmatprep.subr.mxu0 0.0
    %560 = vmatpush1.msra.mxu0 0.0
    %561 = vmatprep.subr.mxu0 0.0
    %562 = vmatpush1.msra.mxu0 0.0
    %563 = vmatprep.subr.mxu0 0.0
    %564 = vmatpush1.msra.mxu0 0.0
    %565 = vmatprep.subr.mxu0 0.0
    %566 = vmatpush1.msra.mxu0 0.0
    %567 = vmatprep.subr.mxu0 0.0
    %568 = vmatpush1.msra.mxu0 0.0
    %569 = vmatprep.subr.mxu0 0.0
    %570 = vmatpush1.msra.mxu0 0.0
    %571 = vmatprep.subr.mxu0 0.0
    %572 = vmatpush1.msra.mxu0 0.0
    %573 = vmatprep.subr.mxu0 0.0
    %574 = vmatpush1.msra.mxu0 0.0
    %575 = vmatprep.subr.mxu0 0.0
    %576 = vmatpush1.msra.mxu0 0.0
    %577 = vmatprep.subr.mxu0 0.0
    %578 = vmatpush1.msra.mxu0 0.0
    %579 = vmatprep.subr.mxu0 0.0
    %580 = vmatpush1.msra.mxu0 0.0
    %581 = vmatprep.subr.mxu0 0.0
    %582 = vmatpush1.msra.mxu0 0.0
    %583 = vmatprep.subr.mxu0 0.0
    %584 = vmatpush1.msra.mxu0 0.0
    %585 = vmatprep.subr.mxu0 0.0
    %586 = vmatpush1.msra.mxu0 0.0
    %587 = vmatprep.subr.mxu0 0.0
    %588 = vmatpush1.msra.mxu0 0.0
    %589 = vmatprep.subr.mxu0 0.0
    %590 = vmatpush1.msra.mxu0 0.0
    %591 = vmatprep.subr.mxu0 0.0
    %592 = vmatpush1.msra.mxu0 0.0
    %593 = vmatprep.subr.mxu0 0.0
    %594 = vmatpush1.msra.mxu0 0.0
    %595 = vmatprep.subr.mxu0 0.0
    %596 = vmatpush1.msra.mxu0 0.0
    %597 = vmatprep.mubr.f32.mxu0 0.0
    %598 = vmatmul.mubr.f32.gmra.mrb[0].mxu0 %v531
    %v599 = vpop.f32.mrb[0].mxu0
    %v600 = vadd.f32 0.0, %v599
    %v601 = vpop.f32.mrb[0].mxu0
    %602 = vdwg.mxu0
    %v603 = vadd.f32 %v206, %v600
    %v604 = vxor.u32 %v603, 2147483648
    %v605 = vmul.f32 %v604, 1.442695
    %v606 = vpow.pop %v605
    %v607 = vadd.f32 %v606, 1.0
    %v608 = vrcp.pop %v607
    %v609 = vmul.f32 1.0, %v608
    %v610 = vtanh.pop %v603
    %v611 = vmul.f32 %v609, %v521
    %613 = vrot.lane.b32.xlu0 %v610, 32
    %v614 = vpop.permute.xlu0 %613
    %v616 = vmul.f32 %v609, %v614
    %618 = vrot.lane.b32.xlu0 %v616, 32
    %v619 = vpop.permute.xlu0 %618
    %v621 = vadd.f32 %v611, %v619
    %v622 = vtanh.pop %v621
    %624 = vrot.lane.b32.xlu0 %v622, 32
    %v625 = vpop.permute.xlu0 %624
    %v627 = vmul.f32 %v609, %v625
    %629 = vrot.lane.b32.xlu0 %v627, 64
    %v630 = vpop.permute.xlu0 %629
    %v631 = vsel %vm229, %v630, 0
    %633 = vmatprep.subr.mxu0 0.0
    %634 = vmatpush1.msra.mxu0 %v66
    %635 = vmatprep.subr.mxu0 0.0
    %636 = vmatpush1.msra.mxu0 %v67
    %637 = vmatprep.subr.mxu0 0.0
    %638 = vmatpush1.msra.mxu0 %v68
    %639 = vmatprep.subr.mxu0 0.0
    %640 = vmatpush1.msra.mxu0 %v69
    %641 = vmatprep.subr.mxu0 0.0
    %642 = vmatpush1.msra.mxu0 0.0
    %643 = vmatprep.subr.mxu0 0.0
    %644 = vmatpush1.msra.mxu0 0.0
    %645 = vmatprep.subr.mxu0 0.0
    %646 = vmatpush1.msra.mxu0 0.0
    %647 = vmatprep.subr.mxu0 0.0
    %648 = vmatpush1.msra.mxu0 0.0
    %649 = vmatprep.subr.mxu0 0.0
    %650 = vmatpush1.msra.mxu0 0.0
    %651 = vmatprep.subr.mxu0 0.0
    %652 = vmatpush1.msra.mxu0 0.0
    %653 = vmatprep.subr.mxu0 0.0
    %654 = vmatpush1.msra.mxu0 0.0
    %655 = vmatprep.subr.mxu0 0.0
    %656 = vmatpush1.msra.mxu0 0.0
    %657 = vmatprep.subr.mxu0 0.0
    %658 = vmatpush1.msra.mxu0 0.0
    %659 = vmatprep.subr.mxu0 0.0
    %660 = vmatpush1.msra.mxu0 0.0
    %661 = vmatprep.subr.mxu0 0.0
    %662 = vmatpush1.msra.mxu0 0.0
    %663 = vmatprep.subr.mxu0 0.0
    %664 = vmatpush1.msra.mxu0 0.0
    %665 = vmatprep.subr.mxu0 0.0
    %666 = vmatpush1.msra.mxu0 0.0
    %667 = vmatprep.subr.mxu0 0.0
    %668 = vmatpush1.msra.mxu0 0.0
    %669 = vmatprep.subr.mxu0 0.0
    %670 = vmatpush1.msra.mxu0 0.0
    %671 = vmatprep.subr.mxu0 0.0
    %672 = vmatpush1.msra.mxu0 0.0
    %673 = vmatprep.subr.mxu0 0.0
    %674 = vmatpush1.msra.mxu0 0.0
    %675 = vmatprep.subr.mxu0 0.0
    %676 = vmatpush1.msra.mxu0 0.0
    %677 = vmatprep.subr.mxu0 0.0
    %678 = vmatpush1.msra.mxu0 0.0
    %679 = vmatprep.subr.mxu0 0.0
    %680 = vmatpush1.msra.mxu0 0.0
    %681 = vmatprep.subr.mxu0 0.0
    %682 = vmatpush1.msra.mxu0 0.0
    %683 = vmatprep.subr.mxu0 0.0
    %684 = vmatpush1.msra.mxu0 0.0
    %685 = vmatprep.subr.mxu0 0.0
    %686 = vmatpush1.msra.mxu0 0.0
    %687 = vmatprep.subr.mxu0 0.0
    %688 = vmatpush1.msra.mxu0 0.0
    %689 = vmatprep.subr.mxu0 0.0
    %690 = vmatpush1.msra.mxu0 0.0
    %691 = vmatprep.subr.mxu0 0.0
    %692 = vmatpush1.msra.mxu0 0.0
    %693 = vmatprep.subr.mxu0 0.0
    %694 = vmatpush1.msra.mxu0 0.0
    %695 = vmatprep.subr.mxu0 0.0
    %696 = vmatpush1.msra.mxu0 0.0
    %697 = vmatprep.mubr.f32.mxu0 0.0
    %698 = vmatmul.mubr.f32.gmra.mrb[0].mxu0 %v631
    %v699 = vpop.f32.mrb[0].mxu0
    %v700 = vadd.f32 0.0, %v699
    %v701 = vpop.f32.mrb[0].mxu0
    %702 = vdwg.mxu0
    %v703 = vadd.f32 %v211, %v700
    %v704 = vxor.u32 %v703, 2147483648
    %v705 = vmul.f32 %v704, 1.442695
    %v706 = vpow.pop %v705
    %v707 = vadd.f32 %v706, 1.0
    %v708 = vrcp.pop %v707
    %v709 = vmul.f32 1.0, %v708
    %v710 = vtanh.pop %v703
    %v711 = vmul.f32 %v709, %v621
    %713 = vrot.lane.b32.xlu0 %v710, 32
    %v714 = vpop.permute.xlu0 %713
    %v716 = vmul.f32 %v709, %v714
    %718 = vrot.lane.b32.xlu0 %v716, 32
    %v719 = vpop.permute.xlu0 %718
    %v721 = vadd.f32 %v711, %v719
    %v722 = vtanh.pop %v721
    %724 = vrot.lane.b32.xlu0 %v722, 32
    %v725 = vpop.permute.xlu0 %724
    %v727 = vmul.f32 %v709, %v725
    %729 = vrot.lane.b32.xlu0 %v727, 64
    %v730 = vpop.permute.xlu0 %729
    %v731 = vsel %vm229, %v730, 0
    %733 = vmatprep.subr.mxu0 0.0
    %734 = vmatpush1.msra.mxu0 %v66
    %735 = vmatprep.subr.mxu0 0.0
    %736 = vmatpush1.msra.mxu0 %v67
    %737 = vmatprep.subr.mxu0 0.0
    %738 = vmatpush1.msra.mxu0 %v68
    %739 = vmatprep.subr.mxu0 0.0
    %740 = vmatpush1.msra.mxu0 %v69
    %741 = vmatprep.subr.mxu0 0.0
    %742 = vmatpush1.msra.mxu0 0.0
    %743 = vmatprep.subr.mxu0 0.0
    %744 = vmatpush1.msra.mxu0 0.0
    %745 = vmatprep.subr.mxu0 0.0
    %746 = vmatpush1.msra.mxu0 0.0
    %747 = vmatprep.subr.mxu0 0.0
    %748 = vmatpush1.msra.mxu0 0.0
    %749 = vmatprep.subr.mxu0 0.0
    %750 = vmatpush1.msra.mxu0 0.0
    %751 = vmatprep.subr.mxu0 0.0
    %752 = vmatpush1.msra.mxu0 0.0
    %753 = vmatprep.subr.mxu0 0.0
    %754 = vmatpush1.msra.mxu0 0.0
    %755 = vmatprep.subr.mxu0 0.0
    %756 = vmatpush1.msra.mxu0 0.0
    %757 = vmatprep.subr.mxu0 0.0
    %758 = vmatpush1.msra.mxu0 0.0
    %759 = vmatprep.subr.mxu0 0.0
    %760 = vmatpush1.msra.mxu0 0.0
    %761 = vmatprep.subr.mxu0 0.0
    %762 = vmatpush1.msra.mxu0 0.0
    %763 = vmatprep.subr.mxu0 0.0
    %764 = vmatpush1.msra.mxu0 0.0
    %765 = vmatprep.subr.mxu0 0.0
    %766 = vmatpush1.msra.mxu0 0.0
    %767 = vmatprep.subr.mxu0 0.0
    %768 = vmatpush1.msra.mxu0 0.0
    %769 = vmatprep.subr.mxu0 0.0
    %770 = vmatpush1.msra.mxu0 0.0
    %771 = vmatprep.subr.mxu0 0.0
    %772 = vmatpush1.msra.mxu0 0.0
    %773 = vmatprep.subr.mxu0 0.0
    %774 = vmatpush1.msra.mxu0 0.0
    %775 = vmatprep.subr.mxu0 0.0
    %776 = vmatpush1.msra.mxu0 0.0
    %777 = vmatprep.subr.mxu0 0.0
    %778 = vmatpush1.msra.mxu0 0.0
    %779 = vmatprep.subr.mxu0 0.0
    %780 = vmatpush1.msra.mxu0 0.0
    %781 = vmatprep.subr.mxu0 0.0
    %782 = vmatpush1.msra.mxu0 0.0
    %783 = vmatprep.subr.mxu0 0.0
    %784 = vmatpush1.msra.mxu0 0.0
    %785 = vmatprep.subr.mxu0 0.0
    %786 = vmatpush1.msra.mxu0 0.0
    %787 = vmatprep.subr.mxu0 0.0
    %788 = vmatpush1.msra.mxu0 0.0
    %789 = vmatprep.subr.mxu0 0.0
    %790 = vmatpush1.msra.mxu0 0.0
    %791 = vmatprep.subr.mxu0 0.0
    %792 = vmatpush1.msra.mxu0 0.0
    %793 = vmatprep.subr.mxu0 0.0
    %794 = vmatpush1.msra.mxu0 0.0
    %795 = vmatprep.subr.mxu0 0.0
    %796 = vmatpush1.msra.mxu0 0.0
    %797 = vmatprep.mubr.f32.mxu0 0.0
    %798 = vmatmul.mubr.f32.gmra.mrb[0].mxu0 %v731
    %v799 = vpop.f32.mrb[0].mxu0
    %v800 = vadd.f32 0.0, %v799
    %v801 = vpop.f32.mrb[0].mxu0
    %802 = vdwg.mxu0
    %v803 = vadd.f32 %v216, %v800
    %v804 = vxor.u32 %v803, 2147483648
    %v805 = vmul.f32 %v804, 1.442695
    %v806 = vpow.pop %v805
    %v807 = vadd.f32 %v806, 1.0
    %v808 = vrcp.pop %v807
    %v809 = vmul.f32 1.0, %v808
    %v810 = vtanh.pop %v803
    %v811 = vmul.f32 %v809, %v721
    %813 = vrot.lane.b32.xlu0 %v810, 32
    %v814 = vpop.permute.xlu0 %813
    %v816 = vmul.f32 %v809, %v814
    %818 = vrot.lane.b32.xlu0 %v816, 32
    %v819 = vpop.permute.xlu0 %818
    %v821 = vadd.f32 %v811, %v819
    %v822 = vtanh.pop %v821
    %824 = vrot.lane.b32.xlu0 %v822, 32
    %v825 = vpop.permute.xlu0 %824
    %v827 = vmul.f32 %v809, %v825
    %829 = vrot.lane.b32.xlu0 %v827, 64
    %v830 = vpop.permute.xlu0 %829
    %v831 = vsel %vm229, %v830, 0
    %833 = vmatprep.subr.mxu0 0.0
    %834 = vmatpush1.msra.mxu0 %v66
    %835 = vmatprep.subr.mxu0 0.0
    %836 = vmatpush1.msra.mxu0 %v67
    %837 = vmatprep.subr.mxu0 0.0
    %838 = vmatpush1.msra.mxu0 %v68
    %839 = vmatprep.subr.mxu0 0.0
    %840 = vmatpush1.msra.mxu0 %v69
    %841 = vmatprep.subr.mxu0 0.0
    %842 = vmatpush1.msra.mxu0 0.0
    %843 = vmatprep.subr.mxu0 0.0
    %844 = vmatpush1.msra.mxu0 0.0
    %845 = vmatprep.subr.mxu0 0.0
    %846 = vmatpush1.msra.mxu0 0.0
    %847 = vmatprep.subr.mxu0 0.0
    %848 = vmatpush1.msra.mxu0 0.0
    %849 = vmatprep.subr.mxu0 0.0
    %850 = vmatpush1.msra.mxu0 0.0
    %851 = vmatprep.subr.mxu0 0.0
    %852 = vmatpush1.msra.mxu0 0.0
    %853 = vmatprep.subr.mxu0 0.0
    %854 = vmatpush1.msra.mxu0 0.0
    %855 = vmatprep.subr.mxu0 0.0
    %856 = vmatpush1.msra.mxu0 0.0
    %857 = vmatprep.subr.mxu0 0.0
    %858 = vmatpush1.msra.mxu0 0.0
    %859 = vmatprep.subr.mxu0 0.0
    %860 = vmatpush1.msra.mxu0 0.0
    %861 = vmatprep.subr.mxu0 0.0
    %862 = vmatpush1.msra.mxu0 0.0
    %863 = vmatprep.subr.mxu0 0.0
    %864 = vmatpush1.msra.mxu0 0.0
    %865 = vmatprep.subr.mxu0 0.0
    %866 = vmatpush1.msra.mxu0 0.0
    %867 = vmatprep.subr.mxu0 0.0
    %868 = vmatpush1.msra.mxu0 0.0
    %869 = vmatprep.subr.mxu0 0.0
    %870 = vmatpush1.msra.mxu0 0.0
    %871 = vmatprep.subr.mxu0 0.0
    %872 = vmatpush1.msra.mxu0 0.0
    %873 = vmatprep.subr.mxu0 0.0
    %874 = vmatpush1.msra.mxu0 0.0
    %875 = vmatprep.subr.mxu0 0.0
    %876 = vmatpush1.msra.mxu0 0.0
    %877 = vmatprep.subr.mxu0 0.0
    %878 = vmatpush1.msra.mxu0 0.0
    %879 = vmatprep.subr.mxu0 0.0
    %880 = vmatpush1.msra.mxu0 0.0
    %881 = vmatprep.subr.mxu0 0.0
    %882 = vmatpush1.msra.mxu0 0.0
    %883 = vmatprep.subr.mxu0 0.0
    %884 = vmatpush1.msra.mxu0 0.0
    %885 = vmatprep.subr.mxu0 0.0
    %886 = vmatpush1.msra.mxu0 0.0
    %887 = vmatprep.subr.mxu0 0.0
    %888 = vmatpush1.msra.mxu0 0.0
    %889 = vmatprep.subr.mxu0 0.0
    %890 = vmatpush1.msra.mxu0 0.0
    %891 = vmatprep.subr.mxu0 0.0
    %892 = vmatpush1.msra.mxu0 0.0
    %893 = vmatprep.subr.mxu0 0.0
    %894 = vmatpush1.msra.mxu0 0.0
    %895 = vmatprep.subr.mxu0 0.0
    %896 = vmatpush1.msra.mxu0 0.0
    %897 = vmatprep.mubr.f32.mxu0 0.0
    %898 = vmatmul.mubr.f32.gmra.mrb[0].mxu0 %v831
    %v899 = vpop.f32.mrb[0].mxu0
    %v900 = vadd.f32 0.0, %v899
    %v901 = vpop.f32.mrb[0].mxu0
    %902 = vdwg.mxu0
    %v903 = vadd.f32 %v221, %v900
    %v904 = vxor.u32 %v903, 2147483648
    %v905 = vmul.f32 %v904, 1.442695
    %v906 = vpow.pop %v905
    %v907 = vadd.f32 %v906, 1.0
    %v908 = vrcp.pop %v907
    %v909 = vmul.f32 1.0, %v908
    %v910 = vtanh.pop %v903
    %v911 = vmul.f32 %v909, %v821
    %913 = vrot.lane.b32.xlu0 %v910, 32
    %v914 = vpop.permute.xlu0 %913
    %v916 = vmul.f32 %v909, %v914
    %918 = vrot.lane.b32.xlu0 %v916, 32
    %v919 = vpop.permute.xlu0 %918
    %v921 = vadd.f32 %v911, %v919
    %v922 = vtanh.pop %v921
    %924 = vrot.lane.b32.xlu0 %v922, 32
    %v925 = vpop.permute.xlu0 %924
    %v927 = vmul.f32 %v909, %v925
    %929 = vrot.lane.b32.xlu0 %v927, 64
    %v930 = vpop.permute.xlu0 %929
    %v931 = vsel %vm229, %v930, 0
    %933 = vmatprep.subr.mxu0 0.0
    %934 = vmatpush1.msra.mxu0 %v66
    %935 = vmatprep.subr.mxu0 0.0
    %936 = vmatpush1.msra.mxu0 %v67
    %937 = vmatprep.subr.mxu0 0.0
    %938 = vmatpush1.msra.mxu0 %v68
    %939 = vmatprep.subr.mxu0 0.0
    %940 = vmatpush1.msra.mxu0 %v69
    %941 = vmatprep.subr.mxu0 0.0
    %942 = vmatpush1.msra.mxu0 0.0
    %943 = vmatprep.subr.mxu0 0.0
    %944 = vmatpush1.msra.mxu0 0.0
    %945 = vmatprep.subr.mxu0 0.0
    %946 = vmatpush1.msra.mxu0 0.0
    %947 = vmatprep.subr.mxu0 0.0
    %948 = vmatpush1.msra.mxu0 0.0
    %949 = vmatprep.subr.mxu0 0.0
    %950 = vmatpush1.msra.mxu0 0.0
    %951 = vmatprep.subr.mxu0 0.0
    %952 = vmatpush1.msra.mxu0 0.0
    %953 = vmatprep.subr.mxu0 0.0
    %954 = vmatpush1.msra.mxu0 0.0
    %955 = vmatprep.subr.mxu0 0.0
    %956 = vmatpush1.msra.mxu0 0.0
    %957 = vmatprep.subr.mxu0 0.0
    %958 = vmatpush1.msra.mxu0 0.0
    %959 = vmatprep.subr.mxu0 0.0
    %960 = vmatpush1.msra.mxu0 0.0
    %961 = vmatprep.subr.mxu0 0.0
    %962 = vmatpush1.msra.mxu0 0.0
    %963 = vmatprep.subr.mxu0 0.0
    %964 = vmatpush1.msra.mxu0 0.0
    %965 = vmatprep.subr.mxu0 0.0
    %966 = vmatpush1.msra.mxu0 0.0
    %967 = vmatprep.subr.mxu0 0.0
    %968 = vmatpush1.msra.mxu0 0.0
    %969 = vmatprep.subr.mxu0 0.0
    %970 = vmatpush1.msra.mxu0 0.0
    %971 = vmatprep.subr.mxu0 0.0
    %972 = vmatpush1.msra.mxu0 0.0
    %973 = vmatprep.subr.mxu0 0.0
    %974 = vmatpush1.msra.mxu0 0.0
    %975 = vmatprep.subr.mxu0 0.0
    %976 = vmatpush1.msra.mxu0 0.0
    %977 = vmatprep.subr.mxu0 0.0
    %978 = vmatpush1.msra.mxu0 0.0
    %979 = vmatprep.subr.mxu0 0.0
    %980 = vmatpush1.msra.mxu0 0.0
    %981 = vmatprep.subr.mxu0 0.0
    %982 = vmatpush1.msra.mxu0 0.0
    %983 = vmatprep.subr.mxu0 0.0
    %984 = vmatpush1.msra.mxu0 0.0
    %985 = vmatprep.subr.mxu0 0.0
    %986 = vmatpush1.msra.mxu0 0.0
    %987 = vmatprep.subr.mxu0 0.0
    %988 = vmatpush1.msra.mxu0 0.0
    %989 = vmatprep.subr.mxu0 0.0
    %990 = vmatpush1.msra.mxu0 0.0
    %991 = vmatprep.subr.mxu0 0.0
    %992 = vmatpush1.msra.mxu0 0.0
    %993 = vmatprep.subr.mxu0 0.0
    %994 = vmatpush1.msra.mxu0 0.0
    %995 = vmatprep.subr.mxu0 0.0
    %996 = vmatpush1.msra.mxu0 0.0
    %997 = vmatprep.mubr.f32.mxu0 0.0
    %998 = vmatmul.mubr.f32.gmra.mrb[0].mxu0 %v931
    %v999 = vpop.f32.mrb[0].mxu0
    %v1000 = vadd.f32 0.0, %v999
    %v1001 = vpop.f32.mrb[0].mxu0
    %1002 = vdwg.mxu0
    %v1003 = vadd.f32 %v226, %v1000
    %v1004 = vxor.u32 %v1003, 2147483648
    %v1005 = vmul.f32 %v1004, 1.442695
    %v1006 = vpow.pop %v1005
    %v1007 = vadd.f32 %v1006, 1.0
    %v1008 = vrcp.pop %v1007
    %v1009 = vmul.f32 1.0, %v1008
    %v1010 = vtanh.pop %v1003
    %v1011 = vmul.f32 %v1009, %v921
    %1013 = vrot.lane.b32.xlu0 %v1010, 32
    %v1014 = vpop.permute.xlu0 %1013
    %v1016 = vmul.f32 %v1009, %v1014
    %1018 = vrot.lane.b32.xlu0 %v1016, 32
    %v1019 = vpop.permute.xlu0 %1018
    %v1021 = vadd.f32 %v1011, %v1019
    %v1022 = vtanh.pop %v1021
    %1024 = vrot.lane.b32.xlu0 %v1022, 32
    %v1025 = vpop.permute.xlu0 %1024
    %v1027 = vmul.f32 %v1009, %v1025
    %v1028 = vld [vmem:[%s8] sm:$0xff]
    %v1029 = vld [vmem:[%s8 + $0x8] sm:$0xff]
    %v1030 = vld [vmem:[%s8 + $0x10] sm:$0xff]
    %v1031 = vld [vmem:[%s8 + $0x18] sm:$0xff]
    %v1032 = vld [vmem:[%s9] sm:$0x1]
    %v1034 = vlaneseq
    %v1035 = vshrl.u32 %v1034, 7
    %v1036 = vsub.s32 0, %v1035
    %v1037 = vrot.slane %v1032, %v1036
    %1040 = vrot.lane.b32.xlu0 %v1027, 64
    %v1041 = vpop.permute.xlu0 %1040
    %v1042 = vsel %vm229, %v1041, 0
    %1044 = vmatprep.subr.mxu0 0.0
    %1045 = vmatpush1.msra.mxu0 %v1028
    %1046 = vmatprep.subr.mxu0 0.0
    %1047 = vmatpush1.msra.mxu0 %v1029
    %1048 = vmatprep.subr.mxu0 0.0
    %1049 = vmatpush1.msra.mxu0 %v1030
    %1050 = vmatprep.subr.mxu0 0.0
    %1051 = vmatpush1.msra.mxu0 %v1031
    %1052 = vmatprep.subr.mxu0 0.0
    %1053 = vmatpush1.msra.mxu0 0.0
    %1054 = vmatprep.subr.mxu0 0.0
    %1055 = vmatpush1.msra.mxu0 0.0
    %1056 = vmatprep.subr.mxu0 0.0
    %1057 = vmatpush1.msra.mxu0 0.0
    %1058 = vmatprep.subr.mxu0 0.0
    %1059 = vmatpush1.msra.mxu0 0.0
    %1060 = vmatprep.subr.mxu0 0.0
    %1061 = vmatpush1.msra.mxu0 0.0
    %1062 = vmatprep.subr.mxu0 0.0
    %1063 = vmatpush1.msra.mxu0 0.0
    %1064 = vmatprep.subr.mxu0 0.0
    %1065 = vmatpush1.msra.mxu0 0.0
    %1066 = vmatprep.subr.mxu0 0.0
    %1067 = vmatpush1.msra.mxu0 0.0
    %1068 = vmatprep.subr.mxu0 0.0
    %1069 = vmatpush1.msra.mxu0 0.0
    %1070 = vmatprep.subr.mxu0 0.0
    %1071 = vmatpush1.msra.mxu0 0.0
    %1072 = vmatprep.subr.mxu0 0.0
    %1073 = vmatpush1.msra.mxu0 0.0
    %1074 = vmatprep.subr.mxu0 0.0
    %1075 = vmatpush1.msra.mxu0 0.0
    %1076 = vmatprep.subr.mxu0 0.0
    %1077 = vmatpush1.msra.mxu0 0.0
    %1078 = vmatprep.subr.mxu0 0.0
    %1079 = vmatpush1.msra.mxu0 0.0
    %1080 = vmatprep.subr.mxu0 0.0
    %1081 = vmatpush1.msra.mxu0 0.0
    %1082 = vmatprep.subr.mxu0 0.0
    %1083 = vmatpush1.msra.mxu0 0.0
    %1084 = vmatprep.subr.mxu0 0.0
    %1085 = vmatpush1.msra.mxu0 0.0
    %1086 = vmatprep.subr.mxu0 0.0
    %1087 = vmatpush1.msra.mxu0 0.0
    %1088 = vmatprep.subr.mxu0 0.0
    %1089 = vmatpush1.msra.mxu0 0.0
    %1090 = vmatprep.subr.mxu0 0.0
    %1091 = vmatpush1.msra.mxu0 0.0
    %1092 = vmatprep.subr.mxu0 0.0
    %1093 = vmatpush1.msra.mxu0 0.0
    %1094 = vmatprep.subr.mxu0 0.0
    %1095 = vmatpush1.msra.mxu0 0.0
    %1096 = vmatprep.subr.mxu0 0.0
    %1097 = vmatpush1.msra.mxu0 0.0
    %1098 = vmatprep.subr.mxu0 0.0
    %1099 = vmatpush1.msra.mxu0 0.0
    %1100 = vmatprep.subr.mxu0 0.0
    %1101 = vmatpush1.msra.mxu0 0.0
    %1102 = vmatprep.subr.mxu0 0.0
    %1103 = vmatpush1.msra.mxu0 0.0
    %1104 = vmatprep.subr.mxu0 0.0
    %1105 = vmatpush1.msra.mxu0 0.0
    %1106 = vmatprep.subr.mxu0 0.0
    %1107 = vmatpush1.msra.mxu0 0.0
    %1108 = vmatprep.mubr.f32.mxu0 0.0
    %1109 = vmatmul.mubr.f32.gmra.mrb[0].mxu0 %v1042
    %v1110 = vpop.f32.mrb[0].mxu0
    %v1111 = vadd.f32 %v1037, %v1110
    %v1112 = vpop.f32.mrb[0].mxu0
    %1113 = vdwg.mxu0
    %v1115 = vlaneseq
    %v1116 = vshrl.u32 %v1115, 7
    %v1117 = vsub.s32 0, %v1116
    %v1118 = vrot.slane %v75, %v1117
    %v1121 = vsel %vm229, %v1111, 0
    %1123 = vmatprep.subr.mxu0 0.0
    %1124 = vmatpush1.msra.mxu0 %v71
    %1125 = vmatprep.subr.mxu0 0.0
    %1126 = vmatpush1.msra.mxu0 %v72
    %1127 = vmatprep.subr.mxu0 0.0
    %1128 = vmatpush1.msra.mxu0 %v73
    %1129 = vmatprep.subr.mxu0 0.0
    %1130 = vmatpush1.msra.mxu0 %v74
    %1131 = vmatprep.subr.mxu0 0.0
    %1132 = vmatpush1.msra.mxu0 0.0
    %1133 = vmatprep.subr.mxu0 0.0
    %1134 = vmatpush1.msra.mxu0 0.0
    %1135 = vmatprep.subr.mxu0 0.0
    %1136 = vmatpush1.msra.mxu0 0.0
    %1137 = vmatprep.subr.mxu0 0.0
    %1138 = vmatpush1.msra.mxu0 0.0
    %1139 = vmatprep.subr.mxu0 0.0
    %1140 = vmatpush1.msra.mxu0 0.0
    %1141 = vmatprep.subr.mxu0 0.0
    %1142 = vmatpush1.msra.mxu0 0.0
    %1143 = vmatprep.subr.mxu0 0.0
    %1144 = vmatpush1.msra.mxu0 0.0
    %1145 = vmatprep.subr.mxu0 0.0
    %1146 = vmatpush1.msra.mxu0 0.0
    %1147 = vmatprep.subr.mxu0 0.0
    %1148 = vmatpush1.msra.mxu0 0.0
    %1149 = vmatprep.subr.mxu0 0.0
    %1150 = vmatpush1.msra.mxu0 0.0
    %1151 = vmatprep.subr.mxu0 0.0
    %1152 = vmatpush1.msra.mxu0 0.0
    %1153 = vmatprep.subr.mxu0 0.0
    %1154 = vmatpush1.msra.mxu0 0.0
    %1155 = vmatprep.subr.mxu0 0.0
    %1156 = vmatpush1.msra.mxu0 0.0
    %1157 = vmatprep.subr.mxu0 0.0
    %1158 = vmatpush1.msra.mxu0 0.0
    %1159 = vmatprep.subr.mxu0 0.0
    %1160 = vmatpush1.msra.mxu0 0.0
    %1161 = vmatprep.subr.mxu0 0.0
    %1162 = vmatpush1.msra.mxu0 0.0
    %1163 = vmatprep.subr.mxu0 0.0
    %1164 = vmatpush1.msra.mxu0 0.0
    %1165 = vmatprep.subr.mxu0 0.0
    %1166 = vmatpush1.msra.mxu0 0.0
    %1167 = vmatprep.subr.mxu0 0.0
    %1168 = vmatpush1.msra.mxu0 0.0
    %1169 = vmatprep.subr.mxu0 0.0
    %1170 = vmatpush1.msra.mxu0 0.0
    %1171 = vmatprep.subr.mxu0 0.0
    %1172 = vmatpush1.msra.mxu0 0.0
    %1173 = vmatprep.subr.mxu0 0.0
    %1174 = vmatpush1.msra.mxu0 0.0
    %1175 = vmatprep.subr.mxu0 0.0
    %1176 = vmatpush1.msra.mxu0 0.0
    %1177 = vmatprep.subr.mxu0 0.0
    %1178 = vmatpush1.msra.mxu0 0.0
    %1179 = vmatprep.subr.mxu0 0.0
    %1180 = vmatpush1.msra.mxu0 0.0
    %1181 = vmatprep.subr.mxu0 0.0
    %1182 = vmatpush1.msra.mxu0 0.0
    %1183 = vmatprep.subr.mxu0 0.0
    %1184 = vmatpush1.msra.mxu0 0.0
    %1185 = vmatprep.subr.mxu0 0.0
    %1186 = vmatpush1.msra.mxu0 0.0
    %1187 = vmatprep.mubr.f32.mxu0 0.0
    %1188 = vmatmul.mubr.f32.gmra.mrb[0].mxu0 %v1121
    %v1189 = vpop.f32.mrb[0].mxu0
    %v1190 = vadd.f32 %v1118, %v1189
    %v1191 = vpop.f32.mrb[0].mxu0
    %1192 = vdwg.mxu0
    %v1193 = vxor.u32 %v1190, 2147483648
    %v1194 = vmul.f32 %v1193, 1.442695
    %v1195 = vpow.pop %v1194
    %v1196 = vadd.f32 %v1195, 1.0
    %v1197 = vrcp.pop %v1196
    %v1198 = vmul.f32 1.0, %v1197
    %v1199 = vtanh.pop %v1190
    %v1200 = vmul.f32 %v1198, %v1111
    %1202 = vrot.lane.b32.xlu0 %v1199, 32
    %v1203 = vpop.permute.xlu0 %1202
    %v1205 = vmul.f32 %v1198, %v1203
    %1207 = vrot.lane.b32.xlu0 %v1205, 32
    %v1208 = vpop.permute.xlu0 %1207
    %v1210 = vadd.f32 %v1200, %v1208
    %v1211 = vtanh.pop %v1210
    %1213 = vrot.lane.b32.xlu0 %v1211, 32
    %v1214 = vpop.permute.xlu0 %1213
    %v1216 = vmul.f32 %v1198, %v1214
    %v1218 = vlaneseq
    %v1219 = vshrl.u32 %v1218, 7
    %v1220 = vsub.s32 0, %v1219
    %v1221 = vrot.slane %v80, %v1220
    %1224 = vrot.lane.b32.xlu0 %v1216, 64
    %v1225 = vpop.permute.xlu0 %1224
    %v1226 = vsel %vm229, %v1225, 0
    %1228 = vmatprep.subr.mxu0 0.0
    %1229 = vmatpush1.msra.mxu0 %v76
    %1230 = vmatprep.subr.mxu0 0.0
    %1231 = vmatpush1.msra.mxu0 %v77
    %1232 = vmatprep.subr.mxu0 0.0
    %1233 = vmatpush1.msra.mxu0 %v78
    %1234 = vmatprep.subr.mxu0 0.0
    %1235 = vmatpush1.msra.mxu0 %v79
    %1236 = vmatprep.subr.mxu0 0.0
    %1237 = vmatpush1.msra.mxu0 0.0
    %1238 = vmatprep.subr.mxu0 0.0
    %1239 = vmatpush1.msra.mxu0 0.0
    %1240 = vmatprep.subr.mxu0 0.0
    %1241 = vmatpush1.msra.mxu0 0.0
    %1242 = vmatprep.subr.mxu0 0.0
    %1243 = vmatpush1.msra.mxu0 0.0
    %1244 = vmatprep.subr.mxu0 0.0
    %1245 = vmatpush1.msra.mxu0 0.0
    %1246 = vmatprep.subr.mxu0 0.0
    %1247 = vmatpush1.msra.mxu0 0.0
    %1248 = vmatprep.subr.mxu0 0.0
    %1249 = vmatpush1.msra.mxu0 0.0
    %1250 = vmatprep.subr.mxu0 0.0
    %1251 = vmatpush1.msra.mxu0 0.0
    %1252 = vmatprep.subr.mxu0 0.0
    %1253 = vmatpush1.msra.mxu0 0.0
    %1254 = vmatprep.subr.mxu0 0.0
    %1255 = vmatpush1.msra.mxu0 0.0
    %1256 = vmatprep.subr.mxu0 0.0
    %1257 = vmatpush1.msra.mxu0 0.0
    %1258 = vmatprep.subr.mxu0 0.0
    %1259 = vmatpush1.msra.mxu0 0.0
    %1260 = vmatprep.subr.mxu0 0.0
    %1261 = vmatpush1.msra.mxu0 0.0
    %1262 = vmatprep.subr.mxu0 0.0
    %1263 = vmatpush1.msra.mxu0 0.0
    %1264 = vmatprep.subr.mxu0 0.0
    %1265 = vmatpush1.msra.mxu0 0.0
    %1266 = vmatprep.subr.mxu0 0.0
    %1267 = vmatpush1.msra.mxu0 0.0
    %1268 = vmatprep.subr.mxu0 0.0
    %1269 = vmatpush1.msra.mxu0 0.0
    %1270 = vmatprep.subr.mxu0 0.0
    %1271 = vmatpush1.msra.mxu0 0.0
    %1272 = vmatprep.subr.mxu0 0.0
    %1273 = vmatpush1.msra.mxu0 0.0
    %1274 = vmatprep.subr.mxu0 0.0
    %1275 = vmatpush1.msra.mxu0 0.0
    %1276 = vmatprep.subr.mxu0 0.0
    %1277 = vmatpush1.msra.mxu0 0.0
    %1278 = vmatprep.subr.mxu0 0.0
    %1279 = vmatpush1.msra.mxu0 0.0
    %1280 = vmatprep.subr.mxu0 0.0
    %1281 = vmatpush1.msra.mxu0 0.0
    %1282 = vmatprep.subr.mxu0 0.0
    %1283 = vmatpush1.msra.mxu0 0.0
    %1284 = vmatprep.subr.mxu0 0.0
    %1285 = vmatpush1.msra.mxu0 0.0
    %1286 = vmatprep.subr.mxu0 0.0
    %1287 = vmatpush1.msra.mxu0 0.0
    %1288 = vmatprep.subr.mxu0 0.0
    %1289 = vmatpush1.msra.mxu0 0.0
    %1290 = vmatprep.subr.mxu0 0.0
    %1291 = vmatpush1.msra.mxu0 0.0
    %1292 = vmatprep.mubr.f32.mxu0 0.0
    %1293 = vmatmul.mubr.f32.gmra.mrb[0].mxu0 %v1226
    %v1294 = vpop.f32.mrb[0].mxu0
    %v1295 = vadd.f32 %v1221, %v1294
    %v1296 = vpop.f32.mrb[0].mxu0
    %1297 = vdwg.mxu0
    %v1298 = vxor.u32 %v1295, 2147483648
    %v1299 = vmul.f32 %v1298, 1.442695
    %v1300 = vpow.pop %v1299
    %v1301 = vadd.f32 %v1300, 1.0
    %v1302 = vrcp.pop %v1301
    %v1303 = vmul.f32 1.0, %v1302
    %v1304 = vtanh.pop %v1295
    %v1305 = vmul.f32 %v1303, %v1210
    %1307 = vrot.lane.b32.xlu0 %v1304, 32
    %v1308 = vpop.permute.xlu0 %1307
    %v1310 = vmul.f32 %v1303, %v1308
    %1312 = vrot.lane.b32.xlu0 %v1310, 32
    %v1313 = vpop.permute.xlu0 %1312
    %v1315 = vadd.f32 %v1305, %v1313
    %v1316 = vtanh.pop %v1315
    %1318 = vrot.lane.b32.xlu0 %v1316, 32
    %v1319 = vpop.permute.xlu0 %1318
    %v1321 = vmul.f32 %v1303, %v1319
    %1323 = vrot.lane.b32.xlu0 %v1321, 64
    %v1324 = vpop.permute.xlu0 %1323
    %v1325 = vsel %vm229, %v1324, 0
    %1327 = vmatprep.subr.mxu0 0.0
    %1328 = vmatpush1.msra.mxu0 %v76
    %1329 = vmatprep.subr.mxu0 0.0
    %1330 = vmatpush1.msra.mxu0 %v77
    %1331 = vmatprep.subr.mxu0 0.0
    %1332 = vmatpush1.msra.mxu0 %v78
    %1333 = vmatprep.subr.mxu0 0.0
    %1334 = vmatpush1.msra.mxu0 %v79
    %1335 = vmatprep.subr.mxu0 0.0
    %1336 = vmatpush1.msra.mxu0 0.0
    %1337 = vmatprep.subr.mxu0 0.0
    %1338 = vmatpush1.msra.mxu0 0.0
    %1339 = vmatprep.subr.mxu0 0.0
    %1340 = vmatpush1.msra.mxu0 0.0
    %1341 = vmatprep.subr.mxu0 0.0
    %1342 = vmatpush1.msra.mxu0 0.0
    %1343 = vmatprep.subr.mxu0 0.0
    %1344 = vmatpush1.msra.mxu0 0.0
    %1345 = vmatprep.subr.mxu0 0.0
    %1346 = vmatpush1.msra.mxu0 0.0
    %1347 = vmatprep.subr.mxu0 0.0
    %1348 = vmatpush1.msra.mxu0 0.0
    %1349 = vmatprep.subr.mxu0 0.0
    %1350 = vmatpush1.msra.mxu0 0.0
    %1351 = vmatprep.subr.mxu0 0.0
    %1352 = vmatpush1.msra.mxu0 0.0
    %1353 = vmatprep.subr.mxu0 0.0
    %1354 = vmatpush1.msra.mxu0 0.0
    %1355 = vmatprep.subr.mxu0 0.0
    %1356 = vmatpush1.msra.mxu0 0.0
    %1357 = vmatprep.subr.mxu0 0.0
    %1358 = vmatpush1.msra.mxu0 0.0
    %1359 = vmatprep.subr.mxu0 0.0
    %1360 = vmatpush1.msra.mxu0 0.0
    %1361 = vmatprep.subr.mxu0 0.0
    %1362 = vmatpush1.msra.mxu0 0.0
    %1363 = vmatprep.subr.mxu0 0.0
    %1364 = vmatpush1.msra.mxu0 0.0
    %1365 = vmatprep.subr.mxu0 0.0
    %1366 = vmatpush1.msra.mxu0 0.0
    %1367 = vmatprep.subr.mxu0 0.0
    %1368 = vmatpush1.msra.mxu0 0.0
    %1369 = vmatprep.subr.mxu0 0.0
    %1370 = vmatpush1.msra.mxu0 0.0
    %1371 = vmatprep.subr.mxu0 0.0
    %1372 = vmatpush1.msra.mxu0 0.0
    %1373 = vmatprep.subr.mxu0 0.0
    %1374 = vmatpush1.msra.mxu0 0.0
    %1375 = vmatprep.subr.mxu0 0.0
    %1376 = vmatpush1.msra.mxu0 0.0
    %1377 = vmatprep.subr.mxu0 0.0
    %1378 = vmatpush1.msra.mxu0 0.0
    %1379 = vmatprep.subr.mxu0 0.0
    %1380 = vmatpush1.msra.mxu0 0.0
    %1381 = vmatprep.subr.mxu0 0.0
    %1382 = vmatpush1.msra.mxu0 0.0
    %1383 = vmatprep.subr.mxu0 0.0
    %1384 = vmatpush1.msra.mxu0 0.0
    %1385 = vmatprep.subr.mxu0 0.0
    %1386 = vmatpush1.msra.mxu0 0.0
    %1387 = vmatprep.subr.mxu0 0.0
    %1388 = vmatpush1.msra.mxu0 0.0
    %1389 = vmatprep.subr.mxu0 0.0
    %1390 = vmatpush1.msra.mxu0 0.0
    %1391 = vmatprep.mubr.f32.mxu0 0.0
    %1392 = vmatmul.mubr.f32.gmra.mrb[0].mxu0 %v1325
    %v1393 = vpop.f32.mrb[0].mxu0
    %v1394 = vadd.f32 %v1221, %v1393
    %v1395 = vpop.f32.mrb[0].mxu0
    %1396 = vdwg.mxu0
    %v1397 = vxor.u32 %v1394, 2147483648
    %v1398 = vmul.f32 %v1397, 1.442695
    %v1399 = vpow.pop %v1398
    %v1400 = vadd.f32 %v1399, 1.0
    %v1401 = vrcp.pop %v1400
    %v1402 = vmul.f32 1.0, %v1401
    %v1403 = vtanh.pop %v1394
    %v1404 = vmul.f32 %v1402, %v1315
    %1406 = vrot.lane.b32.xlu0 %v1403, 32
    %v1407 = vpop.permute.xlu0 %1406
    %v1409 = vmul.f32 %v1402, %v1407
    %1411 = vrot.lane.b32.xlu0 %v1409, 32
    %v1412 = vpop.permute.xlu0 %1411
    %v1414 = vadd.f32 %v1404, %v1412
    %v1415 = vtanh.pop %v1414
    %1417 = vrot.lane.b32.xlu0 %v1415, 32
    %v1418 = vpop.permute.xlu0 %1417
    %v1420 = vmul.f32 %v1402, %v1418
    %1422 = vrot.lane.b32.xlu0 %v1420, 64
    %v1423 = vpop.permute.xlu0 %1422
    %v1424 = vsel %vm229, %v1423, 0
    %1426 = vmatprep.subr.mxu0 0.0
    %1427 = vmatpush1.msra.mxu0 %v76
    %1428 = vmatprep.subr.mxu0 0.0
    %1429 = vmatpush1.msra.mxu0 %v77
    %1430 = vmatprep.subr.mxu0 0.0
    %1431 = vmatpush1.msra.mxu0 %v78
    %1432 = vmatprep.subr.mxu0 0.0
    %1433 = vmatpush1.msra.mxu0 %v79
    %1434 = vmatprep.subr.mxu0 0.0
    %1435 = vmatpush1.msra.mxu0 0.0
    %1436 = vmatprep.subr.mxu0 0.0
    %1437 = vmatpush1.msra.mxu0 0.0
    %1438 = vmatprep.subr.mxu0 0.0
    %1439 = vmatpush1.msra.mxu0 0.0
    %1440 = vmatprep.subr.mxu0 0.0
    %1441 = vmatpush1.msra.mxu0 0.0
    %1442 = vmatprep.subr.mxu0 0.0
    %1443 = vmatpush1.msra.mxu0 0.0
    %1444 = vmatprep.subr.mxu0 0.0
    %1445 = vmatpush1.msra.mxu0 0.0
    %1446 = vmatprep.subr.mxu0 0.0
    %1447 = vmatpush1.msra.mxu0 0.0
    %1448 = vmatprep.subr.mxu0 0.0
    %1449 = vmatpush1.msra.mxu0 0.0
    %1450 = vmatprep.subr.mxu0 0.0
    %1451 = vmatpush1.msra.mxu0 0.0
    %1452 = vmatprep.subr.mxu0 0.0
    %1453 = vmatpush1.msra.mxu0 0.0
    %1454 = vmatprep.subr.mxu0 0.0
    %1455 = vmatpush1.msra.mxu0 0.0
    %1456 = vmatprep.subr.mxu0 0.0
    %1457 = vmatpush1.msra.mxu0 0.0
    %1458 = vmatprep.subr.mxu0 0.0
    %1459 = vmatpush1.msra.mxu0 0.0
    %1460 = vmatprep.subr.mxu0 0.0
    %1461 = vmatpush1.msra.mxu0 0.0
    %1462 = vmatprep.subr.mxu0 0.0
    %1463 = vmatpush1.msra.mxu0 0.0
    %1464 = vmatprep.subr.mxu0 0.0
    %1465 = vmatpush1.msra.mxu0 0.0
    %1466 = vmatprep.subr.mxu0 0.0
    %1467 = vmatpush1.msra.mxu0 0.0
    %1468 = vmatprep.subr.mxu0 0.0
    %1469 = vmatpush1.msra.mxu0 0.0
    %1470 = vmatprep.subr.mxu0 0.0
    %1471 = vmatpush1.msra.mxu0 0.0
    %1472 = vmatprep.subr.mxu0 0.0
    %1473 = vmatpush1.msra.mxu0 0.0
    %1474 = vmatprep.subr.mxu0 0.0
    %1475 = vmatpush1.msra.mxu0 0.0
    %1476 = vmatprep.subr.mxu0 0.0
    %1477 = vmatpush1.msra.mxu0 0.0
    %1478 = vmatprep.subr.mxu0 0.0
    %1479 = vmatpush1.msra.mxu0 0.0
    %1480 = vmatprep.subr.mxu0 0.0
    %1481 = vmatpush1.msra.mxu0 0.0
    %1482 = vmatprep.subr.mxu0 0.0
    %1483 = vmatpush1.msra.mxu0 0.0
    %1484 = vmatprep.subr.mxu0 0.0
    %1485 = vmatpush1.msra.mxu0 0.0
    %1486 = vmatprep.subr.mxu0 0.0
    %1487 = vmatpush1.msra.mxu0 0.0
    %1488 = vmatprep.subr.mxu0 0.0
    %1489 = vmatpush1.msra.mxu0 0.0
    %1490 = vmatprep.mubr.f32.mxu0 0.0
    %1491 = vmatmul.mubr.f32.gmra.mrb[0].mxu0 %v1424
    %v1492 = vpop.f32.mrb[0].mxu0
    %v1493 = vadd.f32 %v1221, %v1492
    %v1494 = vpop.f32.mrb[0].mxu0
    %1495 = vdwg.mxu0
    %v1496 = vxor.u32 %v1493, 2147483648
    %v1497 = vmul.f32 %v1496, 1.442695
    %v1498 = vpow.pop %v1497
    %v1499 = vadd.f32 %v1498, 1.0
    %v1500 = vrcp.pop %v1499
    %v1501 = vmul.f32 1.0, %v1500
    %v1502 = vtanh.pop %v1493
    %v1503 = vmul.f32 %v1501, %v1414
    %1505 = vrot.lane.b32.xlu0 %v1502, 32
    %v1506 = vpop.permute.xlu0 %1505
    %v1508 = vmul.f32 %v1501, %v1506
    %1510 = vrot.lane.b32.xlu0 %v1508, 32
    %v1511 = vpop.permute.xlu0 %1510
    %v1513 = vadd.f32 %v1503, %v1511
    %v1514 = vtanh.pop %v1513
    %1516 = vrot.lane.b32.xlu0 %v1514, 32
    %v1517 = vpop.permute.xlu0 %1516
    %v1519 = vmul.f32 %v1501, %v1517
    %1521 = vrot.lane.b32.xlu0 %v1519, 64
    %v1522 = vpop.permute.xlu0 %1521
    %v1523 = vsel %vm229, %v1522, 0
    %1525 = vmatprep.subr.mxu0 0.0
    %1526 = vmatpush1.msra.mxu0 %v76
    %1527 = vmatprep.subr.mxu0 0.0
    %1528 = vmatpush1.msra.mxu0 %v77
    %1529 = vmatprep.subr.mxu0 0.0
    %1530 = vmatpush1.msra.mxu0 %v78
    %1531 = vmatprep.subr.mxu0 0.0
    %1532 = vmatpush1.msra.mxu0 %v79
    %1533 = vmatprep.subr.mxu0 0.0
    %1534 = vmatpush1.msra.mxu0 0.0
    %1535 = vmatprep.subr.mxu0 0.0
    %1536 = vmatpush1.msra.mxu0 0.0
    %1537 = vmatprep.subr.mxu0 0.0
    %1538 = vmatpush1.msra.mxu0 0.0
    %1539 = vmatprep.subr.mxu0 0.0
    %1540 = vmatpush1.msra.mxu0 0.0
    %1541 = vmatprep.subr.mxu0 0.0
    %1542 = vmatpush1.msra.mxu0 0.0
    %1543 = vmatprep.subr.mxu0 0.0
    %1544 = vmatpush1.msra.mxu0 0.0
    %1545 = vmatprep.subr.mxu0 0.0
    %1546 = vmatpush1.msra.mxu0 0.0
    %1547 = vmatprep.subr.mxu0 0.0
    %1548 = vmatpush1.msra.mxu0 0.0
    %1549 = vmatprep.subr.mxu0 0.0
    %1550 = vmatpush1.msra.mxu0 0.0
    %1551 = vmatprep.subr.mxu0 0.0
    %1552 = vmatpush1.msra.mxu0 0.0
    %1553 = vmatprep.subr.mxu0 0.0
    %1554 = vmatpush1.msra.mxu0 0.0
    %1555 = vmatprep.subr.mxu0 0.0
    %1556 = vmatpush1.msra.mxu0 0.0
    %1557 = vmatprep.subr.mxu0 0.0
    %1558 = vmatpush1.msra.mxu0 0.0
    %1559 = vmatprep.subr.mxu0 0.0
    %1560 = vmatpush1.msra.mxu0 0.0
    %1561 = vmatprep.subr.mxu0 0.0
    %1562 = vmatpush1.msra.mxu0 0.0
    %1563 = vmatprep.subr.mxu0 0.0
    %1564 = vmatpush1.msra.mxu0 0.0
    %1565 = vmatprep.subr.mxu0 0.0
    %1566 = vmatpush1.msra.mxu0 0.0
    %1567 = vmatprep.subr.mxu0 0.0
    %1568 = vmatpush1.msra.mxu0 0.0
    %1569 = vmatprep.subr.mxu0 0.0
    %1570 = vmatpush1.msra.mxu0 0.0
    %1571 = vmatprep.subr.mxu0 0.0
    %1572 = vmatpush1.msra.mxu0 0.0
    %1573 = vmatprep.subr.mxu0 0.0
    %1574 = vmatpush1.msra.mxu0 0.0
    %1575 = vmatprep.subr.mxu0 0.0
    %1576 = vmatpush1.msra.mxu0 0.0
    %1577 = vmatprep.subr.mxu0 0.0
    %1578 = vmatpush1.msra.mxu0 0.0
    %1579 = vmatprep.subr.mxu0 0.0
    %1580 = vmatpush1.msra.mxu0 0.0
    %1581 = vmatprep.subr.mxu0 0.0
    %1582 = vmatpush1.msra.mxu0 0.0
    %1583 = vmatprep.subr.mxu0 0.0
    %1584 = vmatpush1.msra.mxu0 0.0
    %1585 = vmatprep.subr.mxu0 0.0
    %1586 = vmatpush1.msra.mxu0 0.0
    %1587 = vmatprep.subr.mxu0 0.0
    %1588 = vmatpush1.msra.mxu0 0.0
    %1589 = vmatprep.mubr.f32.mxu0 0.0
    %1590 = vmatmul.mubr.f32.gmra.mrb[0].mxu0 %v1523
    %v1591 = vpop.f32.mrb[0].mxu0
    %v1592 = vadd.f32 %v1221, %v1591
    %v1593 = vpop.f32.mrb[0].mxu0
    %1594 = vdwg.mxu0
    %v1595 = vxor.u32 %v1592, 2147483648
    %v1596 = vmul.f32 %v1595, 1.442695
    %v1597 = vpow.pop %v1596
    %v1598 = vadd.f32 %v1597, 1.0
    %v1599 = vrcp.pop %v1598
    %v1600 = vmul.f32 1.0, %v1599
    %v1601 = vtanh.pop %v1592
    %v1602 = vmul.f32 %v1600, %v1513
    %1604 = vrot.lane.b32.xlu0 %v1601, 32
    %v1605 = vpop.permute.xlu0 %1604
    %v1607 = vmul.f32 %v1600, %v1605
    %1609 = vrot.lane.b32.xlu0 %v1607, 32
    %v1610 = vpop.permute.xlu0 %1609
    %v1612 = vadd.f32 %v1602, %v1610
    %v1613 = vtanh.pop %v1612
    %1615 = vrot.lane.b32.xlu0 %v1613, 32
    %v1616 = vpop.permute.xlu0 %1615
    %v1618 = vmul.f32 %v1600, %v1616
    %1620 = vrot.lane.b32.xlu0 %v1618, 64
    %v1621 = vpop.permute.xlu0 %1620
    %v1622 = vsel %vm229, %v1621, 0
    %1624 = vmatprep.subr.mxu0 0.0
    %1625 = vmatpush1.msra.mxu0 %v76
    %1626 = vmatprep.subr.mxu0 0.0
    %1627 = vmatpush1.msra.mxu0 %v77
    %1628 = vmatprep.subr.mxu0 0.0
    %1629 = vmatpush1.msra.mxu0 %v78
    %1630 = vmatprep.subr.mxu0 0.0
    %1631 = vmatpush1.msra.mxu0 %v79
    %1632 = vmatprep.subr.mxu0 0.0
    %1633 = vmatpush1.msra.mxu0 0.0
    %1634 = vmatprep.subr.mxu0 0.0
    %1635 = vmatpush1.msra.mxu0 0.0
    %1636 = vmatprep.subr.mxu0 0.0
    %1637 = vmatpush1.msra.mxu0 0.0
    %1638 = vmatprep.subr.mxu0 0.0
    %1639 = vmatpush1.msra.mxu0 0.0
    %1640 = vmatprep.subr.mxu0 0.0
    %1641 = vmatpush1.msra.mxu0 0.0
    %1642 = vmatprep.subr.mxu0 0.0
    %1643 = vmatpush1.msra.mxu0 0.0
    %1644 = vmatprep.subr.mxu0 0.0
    %1645 = vmatpush1.msra.mxu0 0.0
    %1646 = vmatprep.subr.mxu0 0.0
    %1647 = vmatpush1.msra.mxu0 0.0
    %1648 = vmatprep.subr.mxu0 0.0
    %1649 = vmatpush1.msra.mxu0 0.0
    %1650 = vmatprep.subr.mxu0 0.0
    %1651 = vmatpush1.msra.mxu0 0.0
    %1652 = vmatprep.subr.mxu0 0.0
    %1653 = vmatpush1.msra.mxu0 0.0
    %1654 = vmatprep.subr.mxu0 0.0
    %1655 = vmatpush1.msra.mxu0 0.0
    %1656 = vmatprep.subr.mxu0 0.0
    %1657 = vmatpush1.msra.mxu0 0.0
    %1658 = vmatprep.subr.mxu0 0.0
    %1659 = vmatpush1.msra.mxu0 0.0
    %1660 = vmatprep.subr.mxu0 0.0
    %1661 = vmatpush1.msra.mxu0 0.0
    %1662 = vmatprep.subr.mxu0 0.0
    %1663 = vmatpush1.msra.mxu0 0.0
    %1664 = vmatprep.subr.mxu0 0.0
    %1665 = vmatpush1.msra.mxu0 0.0
    %1666 = vmatprep.subr.mxu0 0.0
    %1667 = vmatpush1.msra.mxu0 0.0
    %1668 = vmatprep.subr.mxu0 0.0
    %1669 = vmatpush1.msra.mxu0 0.0
    %1670 = vmatprep.subr.mxu0 0.0
    %1671 = vmatpush1.msra.mxu0 0.0
    %1672 = vmatprep.subr.mxu0 0.0
    %1673 = vmatpush1.msra.mxu0 0.0
    %1674 = vmatprep.subr.mxu0 0.0
    %1675 = vmatpush1.msra.mxu0 0.0
    %1676 = vmatprep.subr.mxu0 0.0
    %1677 = vmatpush1.msra.mxu0 0.0
    %1678 = vmatprep.subr.mxu0 0.0
    %1679 = vmatpush1.msra.mxu0 0.0
    %1680 = vmatprep.subr.mxu0 0.0
    %1681 = vmatpush1.msra.mxu0 0.0
    %1682 = vmatprep.subr.mxu0 0.0
    %1683 = vmatpush1.msra.mxu0 0.0
    %1684 = vmatprep.subr.mxu0 0.0
    %1685 = vmatpush1.msra.mxu0 0.0
    %1686 = vmatprep.subr.mxu0 0.0
    %1687 = vmatpush1.msra.mxu0 0.0
    %1688 = vmatprep.mubr.f32.mxu0 0.0
    %1689 = vmatmul.mubr.f32.gmra.mrb[0].mxu0 %v1622
    %v1690 = vpop.f32.mrb[0].mxu0
    %v1691 = vadd.f32 %v1221, %v1690
    %v1692 = vpop.f32.mrb[0].mxu0
    %1693 = vdwg.mxu0
    %v1694 = vxor.u32 %v1691, 2147483648
    %v1695 = vmul.f32 %v1694, 1.442695
    %v1696 = vpow.pop %v1695
    %v1697 = vadd.f32 %v1696, 1.0
    %v1698 = vrcp.pop %v1697
    %v1699 = vmul.f32 1.0, %v1698
    %v1700 = vtanh.pop %v1691
    %v1701 = vmul.f32 %v1699, %v1612
    %1703 = vrot.lane.b32.xlu0 %v1700, 32
    %v1704 = vpop.permute.xlu0 %1703
    %v1706 = vmul.f32 %v1699, %v1704
    %1708 = vrot.lane.b32.xlu0 %v1706, 32
    %v1709 = vpop.permute.xlu0 %1708
    %v1711 = vadd.f32 %v1701, %v1709
    %v1712 = vtanh.pop %v1711
    %1714 = vrot.lane.b32.xlu0 %v1712, 32
    %v1715 = vpop.permute.xlu0 %1714
    %v1717 = vmul.f32 %v1699, %v1715
    %v1718 = vld [vmem:[%s10] sm:$0xff]
    %v1719 = vld [vmem:[%s10 + $0x8] sm:$0xff]
    %v1720 = vld [vmem:[%s10 + $0x10] sm:$0xff]
    %v1721 = vld [vmem:[%s10 + $0x18] sm:$0xff]
    %v1722 = vld [vmem:[%s11] sm:$0x1]
    %v1724 = vlaneseq
    %v1725 = vshrl.u32 %v1724, 7
    %v1726 = vsub.s32 0, %v1725
    %v1727 = vrot.slane %v1722, %v1726
    %1730 = vrot.lane.b32.xlu0 %v1717, 64
    %v1731 = vpop.permute.xlu0 %1730
    %v1732 = vsel %vm229, %v1731, 0
    %1734 = vmatprep.subr.mxu0 0.0
    %1735 = vmatpush1.msra.mxu0 %v1718
    %1736 = vmatprep.subr.mxu0 0.0
    %1737 = vmatpush1.msra.mxu0 %v1719
    %1738 = vmatprep.subr.mxu0 0.0
    %1739 = vmatpush1.msra.mxu0 %v1720
    %1740 = vmatprep.subr.mxu0 0.0
    %1741 = vmatpush1.msra.mxu0 %v1721
    %1742 = vmatprep.subr.mxu0 0.0
    %1743 = vmatpush1.msra.mxu0 0.0
    %1744 = vmatprep.subr.mxu0 0.0
    %1745 = vmatpush1.msra.mxu0 0.0
    %1746 = vmatprep.subr.mxu0 0.0
    %1747 = vmatpush1.msra.mxu0 0.0
    %1748 = vmatprep.subr.mxu0 0.0
    %1749 = vmatpush1.msra.mxu0 0.0
    %1750 = vmatprep.subr.mxu0 0.0
    %1751 = vmatpush1.msra.mxu0 0.0
    %1752 = vmatprep.subr.mxu0 0.0
    %1753 = vmatpush1.msra.mxu0 0.0
    %1754 = vmatprep.subr.mxu0 0.0
    %1755 = vmatpush1.msra.mxu0 0.0
    %1756 = vmatprep.subr.mxu0 0.0
    %1757 = vmatpush1.msra.mxu0 0.0
    %1758 = vmatprep.subr.mxu0 0.0
    %1759 = vmatpush1.msra.mxu0 0.0
    %1760 = vmatprep.subr.mxu0 0.0
    %1761 = vmatpush1.msra.mxu0 0.0
    %1762 = vmatprep.subr.mxu0 0.0
    %1763 = vmatpush1.msra.mxu0 0.0
    %1764 = vmatprep.subr.mxu0 0.0
    %1765 = vmatpush1.msra.mxu0 0.0
    %1766 = vmatprep.subr.mxu0 0.0
    %1767 = vmatpush1.msra.mxu0 0.0
    %1768 = vmatprep.subr.mxu0 0.0
    %1769 = vmatpush1.msra.mxu0 0.0
    %1770 = vmatprep.subr.mxu0 0.0
    %1771 = vmatpush1.msra.mxu0 0.0
    %1772 = vmatprep.subr.mxu0 0.0
    %1773 = vmatpush1.msra.mxu0 0.0
    %1774 = vmatprep.subr.mxu0 0.0
    %1775 = vmatpush1.msra.mxu0 0.0
    %1776 = vmatprep.subr.mxu0 0.0
    %1777 = vmatpush1.msra.mxu0 0.0
    %1778 = vmatprep.subr.mxu0 0.0
    %1779 = vmatpush1.msra.mxu0 0.0
    %1780 = vmatprep.subr.mxu0 0.0
    %1781 = vmatpush1.msra.mxu0 0.0
    %1782 = vmatprep.subr.mxu0 0.0
    %1783 = vmatpush1.msra.mxu0 0.0
    %1784 = vmatprep.subr.mxu0 0.0
    %1785 = vmatpush1.msra.mxu0 0.0
    %1786 = vmatprep.subr.mxu0 0.0
    %1787 = vmatpush1.msra.mxu0 0.0
    %1788 = vmatprep.subr.mxu0 0.0
    %1789 = vmatpush1.msra.mxu0 0.0
    %1790 = vmatprep.subr.mxu0 0.0
    %1791 = vmatpush1.msra.mxu0 0.0
    %1792 = vmatprep.subr.mxu0 0.0
    %1793 = vmatpush1.msra.mxu0 0.0
    %1794 = vmatprep.subr.mxu0 0.0
    %1795 = vmatpush1.msra.mxu0 0.0
    %1796 = vmatprep.subr.mxu0 0.0
    %1797 = vmatpush1.msra.mxu0 0.0
    %1798 = vmatprep.mubr.f32.mxu0 0.0
    %1799 = vmatmul.mubr.f32.gmra.mrb[0].mxu0 %v1226
    %v1800 = vpop.f32.mrb[0].mxu0
    %v1801 = vadd.f32 %v1727, %v1800
    %v1802 = vpop.f32.mrb[0].mxu0
    %1803 = vmatprep.mubr.f32.mxu0 0.0
    %1804 = vmatmul.mubr.f32.gmra.mrb[0].mxu0 %v1325
    %v1805 = vpop.f32.mrb[0].mxu0
    %v1806 = vadd.f32 %v1727, %v1805
    %v1807 = vpop.f32.mrb[0].mxu0
    %1808 = vmatprep.mubr.f32.mxu0 0.0
    %1809 = vmatmul.mubr.f32.gmra.mrb[0].mxu0 %v1424
    %v1810 = vpop.f32.mrb[0].mxu0
    %v1811 = vadd.f32 %v1727, %v1810
    %v1812 = vpop.f32.mrb[0].mxu0
    %1813 = vmatprep.mubr.f32.mxu0 0.0
    %1814 = vmatmul.mubr.f32.gmra.mrb[0].mxu0 %v1523
    %v1815 = vpop.f32.mrb[0].mxu0
    %v1816 = vadd.f32 %v1727, %v1815
    %v1817 = vpop.f32.mrb[0].mxu0
    %1818 = vmatprep.mubr.f32.mxu0 0.0
    %1819 = vmatmul.mubr.f32.gmra.mrb[0].mxu0 %v1622
    %v1820 = vpop.f32.mrb[0].mxu0
    %v1821 = vadd.f32 %v1727, %v1820
    %v1822 = vpop.f32.mrb[0].mxu0
    %1823 = vmatprep.mubr.f32.mxu0 0.0
    %1824 = vmatmul.mubr.f32.gmra.mrb[0].mxu0 %v1732
    %v1825 = vpop.f32.mrb[0].mxu0
    %v1826 = vadd.f32 %v1727, %v1825
    %v1827 = vpop.f32.mrb[0].mxu0
    %1828 = vdwg.mxu0
    %1829 = vst.msk [vmem:[%s12] sm:$0xff] %vm95, %v1801
    %1830 = vst.msk [vmem:[%s12 + $0x8] sm:$0xff] %vm95, %v1806
    %1831 = vst.msk [vmem:[%s12 + $0x10] sm:$0xff] %vm95, %v1811
    %1832 = vst.msk [vmem:[%s12 + $0x18] sm:$0xff] %vm95, %v1816
    %1833 = vst.msk [vmem:[%s12 + $0x20] sm:$0xff] %vm95, %v1821
    %1834 = vst.msk [vmem:[%s12 + $0x28] sm:$0xff] %vm95, %v1826
    // Predicated region
    $region58: #{tpu_custom_call.1} parent=1 // pred_check
      _
    $region59: #{tpu_custom_call.1} parent=1 // pred_check_branch
      %1836 = sbr.rel (0) target = $region61
    $region60: #{tpu_custom_call.1} parent=1 // pred_region
      _
    $region61: #{tpu_custom_call.1} parent=1 // pred_fallthru
      _
    // Predicated region
    $region62: #{tpu_custom_call.1} parent=1 // pred_check
      _
    $region63: #{tpu_custom_call.1} parent=1 // pred_check_branch
      %1838 = sbr.rel (0) target = $region65
    $region64: #{tpu_custom_call.1} parent=1 // pred_region
      _
    $region65: #{tpu_custom_call.1} parent=1 // pred_fallthru
      _
    %1839 = vsyncpa [#allocation3], 1
    %1840 = vsyncpa [#allocation5], 1

</llo_original>
